<compile_context>
chip_gen: v5e
topology: v5e:2x2
jax: 0.10.0
libtpu: 0.0.40
codegen_flags: <defaults>
</compile_context>

<pallas_src>
import jax
import jax.numpy as jnp
from jax.experimental import pallas as pl
from jax.experimental.pallas import tpu as pltpu

INPUT_SIZE = 28 * 28        # 784
PADDED_INPUT = 896          # 7 * 128  (zero-padded K for layer 1)
H1 = 512
H2 = 128
NUM_CLASSES = 10
OUT_PAD = 128               # lane-dense padded output width


def _round_up(x, m):
    return ((x + m - 1) // m) * m


def mlp_kernel(x_ref, w1_ref, b1_ref, w2_ref, b2_ref, w3_ref, b3_ref, o_ref):
    # Layer 1: Linear(896 -> 512) + ReLU   (bf16 MXU matmul, f32 accumulate)
    h1 = jnp.dot(x_ref[...], w1_ref[...], preferred_element_type=jnp.float32)
    h1 = jnp.maximum(h1 + b1_ref[...], 0.0).astype(jnp.bfloat16)
    # Layer 2: Linear(512 -> 128) + ReLU
    h2 = jnp.dot(h1, w2_ref[...], preferred_element_type=jnp.float32)
    h2 = jnp.maximum(h2 + b2_ref[...], 0.0).astype(jnp.bfloat16)
    # Layer 3: Linear(128 -> 128 padded), no activation (cols >= 10 are zero weights)
    out = jnp.dot(h2, w3_ref[...], preferred_element_type=jnp.float32)
    o_ref[...] = (out + b3_ref[...]).astype(o_ref.dtype)


def nn_forward(x, w1, b1, w2, b2, w3, b3, *, batch_tile=256):
    B, D = x.shape
    assert D == INPUT_SIZE

    # Adaptive tile: large batches use batch_tile rows per grid step; small batches
    # shrink the tile (rounded to a multiple of 16 for bf16 sublane packing) instead
    # of padding the batch all the way up to batch_tile.
    bt = min(batch_tile, _round_up(B, 16))
    B_pad = _round_up(B, bt)
    grid = (B_pad // bt,)

    bf16 = jnp.bfloat16
    f32 = jnp.float32

    # Zero-pad batch rows and feature columns; cast to bf16 for the MXU.
    x_p = jnp.zeros((B_pad, PADDED_INPUT), bf16).at[:B, :D].set(x.astype(bf16))
    w1_p = jnp.zeros((PADDED_INPUT, H1), bf16).at[:D, :].set(w1.astype(bf16))
    w2_b = w2.astype(bf16)
    w3_p = jnp.zeros((H2, OUT_PAD), bf16).at[:, :NUM_CLASSES].set(w3.astype(bf16))

    # Biases stay f32 (added to f32 accumulators); kept 2-D for clean layout.
    b1_2d = b1.reshape(1, H1).astype(f32)
    b2_2d = b2.reshape(1, H2).astype(f32)
    b3_2d = jnp.zeros((1, OUT_PAD), f32).at[:, :NUM_CLASSES].set(b3.astype(f32))

    out_padded = pl.pallas_call(
        mlp_kernel,
        out_shape=jax.ShapeDtypeStruct((B_pad, OUT_PAD), f32),
        grid_spec=pltpu.PrefetchScalarGridSpec(
            num_scalar_prefetch=0,
            grid=grid,
            in_specs=[
                pl.BlockSpec((bt, PADDED_INPUT), lambda i: (i, 0)),   # x tile (streamed)
                pl.BlockSpec((PADDED_INPUT, H1), lambda i: (0, 0)),   # W1 (resident)
                pl.BlockSpec((1, H1), lambda i: (0, 0)),              # b1
                pl.BlockSpec((H1, H2), lambda i: (0, 0)),             # W2
                pl.BlockSpec((1, H2), lambda i: (0, 0)),              # b2
                pl.BlockSpec((H2, OUT_PAD), lambda i: (0, 0)),        # W3 (lane-padded)
                pl.BlockSpec((1, OUT_PAD), lambda i: (0, 0)),         # b3 (lane-padded)
            ],
            out_specs=pl.BlockSpec((bt, OUT_PAD), lambda i: (i, 0)),
        ),
        compiler_params=pltpu.CompilerParams(
            dimension_semantics=("parallel",),
            vmem_limit_bytes=32 * 1024 * 1024,
        ),
    )(x_p, w1_p, b1_2d, w2_b, b2_2d, w3_p, b3_2d)

    # Strip batch padding and the lane padding of the last layer.
    return out_padded[:B, :NUM_CLASSES].astype(x.dtype)


def init_params(key):
    """Deterministic init mimicking PyTorch's default Linear init
    (uniform(-1/sqrt(fan_in), 1/sqrt(fan_in)))."""
    k1, k2, k3, k4, k5, k6 = jax.random.split(key, 6)

    def lin(kw, kb, fan_in, fan_out):
        bound = 1.0 / jnp.sqrt(fan_in)
        w = jax.random.uniform(kw, (fan_in, fan_out), jnp.float32, -bound, bound)
        b = jax.random.uniform(kb, (fan_out,), jnp.float32, -bound, bound)
        return w, b

    w1, b1 = lin(k1, k2, INPUT_SIZE, H1)
    w2, b2 = lin(k3, k4, H1, H2)
    w3, b3 = lin(k5, k6, H2, NUM_CLASSES)
    return w1, b1, w2, b2, w3, b3


if __name__ == "__main__":
    key = jax.random.PRNGKey(0)
    kx, kp = jax.random.split(key)

    batch = 8
    x = jax.random.normal(kx, (batch, INPUT_SIZE), dtype=jnp.float32)
    w1, b1, w2, b2, w3, b3 = init_params(kp)

    out = nn_forward(x, w1, b1, w2, b2, w3, b3)
    out = jax.block_until_ready(out)
    assert out.shape == (batch, NUM_CLASSES)

    # Reference with the same bf16-weight / f32-accumulate math (tight check).
    bf16 = jnp.bfloat16
    xb = x.astype(bf16)
    h1 = jnp.maximum(
        jnp.dot(xb, w1.astype(bf16), preferred_element_type=jnp.float32) + b1, 0.0
    ).astype(bf16)
    h2 = jnp.maximum(
        jnp.dot(h1, w2.astype(bf16), preferred_element_type=jnp.float32) + b2, 0.0
    ).astype(bf16)
    ref_bf16 = jnp.dot(h2, w3.astype(bf16), preferred_element_type=jnp.float32) + b3
    assert jnp.allclose(out, ref_bf16, atol=1e-2, rtol=1e-2)

    # Looser sanity check against the full-f32 reference (bf16 rounding error budget).
    h1f = jnp.maximum(x @ w1 + b1, 0.0)
    h2f = jnp.maximum(h1f @ w2 + b2, 0.0)
    ref_f32 = h2f @ w3 + b3
    assert jnp.allclose(out, ref_f32, atol=5e-2, rtol=5e-2)

    print("KERNEL_OK")
</pallas_src>

<mosaic_0001>
module attributes {stable_mosaic.version = 11 : i64} {
  func.func @mlp_kernel(%arg0: i32, %arg1: memref<16x896xbf16, #tpu.memory_space<vmem>>, %arg2: memref<896x512xbf16, #tpu.memory_space<vmem>>, %arg3: memref<1x512xf32, #tpu.memory_space<vmem>>, %arg4: memref<512x128xbf16, #tpu.memory_space<vmem>>, %arg5: memref<1x128xf32, #tpu.memory_space<vmem>>, %arg6: memref<128x128xbf16, #tpu.memory_space<vmem>>, %arg7: memref<1x128xf32, #tpu.memory_space<vmem>>, %arg8: memref<16x128xf32, #tpu.memory_space<vmem>>) attributes {dimension_semantics = [#tpu.dimension_semantics<parallel>], iteration_bounds = array<i64: 1>, scalar_prefetch = 0 : i64, scratch_operands = 0 : i64, tpu.core_type = #tpu.core_type<tc>, window_params = [{transform_indices = @transform_0, window_bounds = array<i64: 16, 896>}, {pipeline_mode = #tpu.pipeline_mode<synchronous>, transform_indices = @transform_1, window_bounds = array<i64: 896, 512>}, {pipeline_mode = #tpu.pipeline_mode<synchronous>, transform_indices = @transform_2, window_bounds = array<i64: 1, 512>}, {pipeline_mode = #tpu.pipeline_mode<synchronous>, transform_indices = @transform_3, window_bounds = array<i64: 512, 128>}, {pipeline_mode = #tpu.pipeline_mode<synchronous>, transform_indices = @transform_4, window_bounds = array<i64: 1, 128>}, {pipeline_mode = #tpu.pipeline_mode<synchronous>, transform_indices = @transform_5, window_bounds = array<i64: 128, 128>}, {pipeline_mode = #tpu.pipeline_mode<synchronous>, transform_indices = @transform_6, window_bounds = array<i64: 1, 128>}, {transform_indices = @transform_7, window_bounds = array<i64: 16, 128>}]} {
    %c0 = arith.constant 0 : index
    %c0_0 = arith.constant 0 : index
    %0 = vector.load %arg1[%c0, %c0_0] : memref<16x896xbf16, #tpu.memory_space<vmem>>, vector<16x896xbf16>
    %c0_1 = arith.constant 0 : index
    %c0_2 = arith.constant 0 : index
    %1 = vector.load %arg2[%c0_1, %c0_2] : memref<896x512xbf16, #tpu.memory_space<vmem>>, vector<896x512xbf16>
    %cst = arith.constant dense<0.000000e+00> : vector<16x512xf32>
    %2 = tpu.matmul %0, %1, %cst {dimension_numbers = #tpu.dot_dimension_numbers<[1], [0], [0], [1], [0, 0, 1, 1], [], []>} : vector<16x896xbf16>, vector<896x512xbf16>, vector<16x512xf32> -> vector<16x512xf32>
    %c0_3 = arith.constant 0 : index
    %c0_4 = arith.constant 0 : index
    %3 = vector.load %arg3[%c0_3, %c0_4] : memref<1x512xf32, #tpu.memory_space<vmem>>, vector<1x512xf32>
    %4 = vector.broadcast %3 : vector<1x512xf32> to vector<16x512xf32>
    %5 = arith.addf %2, %4 : vector<16x512xf32>
    %cst_5 = arith.constant 0.000000e+00 : f32
    %6 = vector.broadcast %cst_5 : f32 to vector<16x512xf32>
    %7 = arith.maximumf %5, %6 : vector<16x512xf32>
    %8 = arith.truncf %7 : vector<16x512xf32> to vector<16x512xbf16>
    %c0_6 = arith.constant 0 : index
    %c0_7 = arith.constant 0 : index
    %9 = vector.load %arg4[%c0_6, %c0_7] : memref<512x128xbf16, #tpu.memory_space<vmem>>, vector<512x128xbf16>
    %cst_8 = arith.constant dense<0.000000e+00> : vector<16x128xf32>
    %10 = tpu.matmul %8, %9, %cst_8 {dimension_numbers = #tpu.dot_dimension_numbers<[1], [0], [0], [1], [0, 0, 1, 1], [], []>} : vector<16x512xbf16>, vector<512x128xbf16>, vector<16x128xf32> -> vector<16x128xf32>
    %c0_9 = arith.constant 0 : index
    %c0_10 = arith.constant 0 : index
    %11 = vector.load %arg5[%c0_9, %c0_10] : memref<1x128xf32, #tpu.memory_space<vmem>>, vector<1x128xf32>
    %12 = vector.broadcast %11 : vector<1x128xf32> to vector<16x128xf32>
    %13 = arith.addf %10, %12 : vector<16x128xf32>
    %cst_11 = arith.constant 0.000000e+00 : f32
    %14 = vector.broadcast %cst_11 : f32 to vector<16x128xf32>
    %15 = arith.maximumf %13, %14 : vector<16x128xf32>
    %16 = arith.truncf %15 : vector<16x128xf32> to vector<16x128xbf16>
    %c0_12 = arith.constant 0 : index
    %c0_13 = arith.constant 0 : index
    %17 = vector.load %arg6[%c0_12, %c0_13] : memref<128x128xbf16, #tpu.memory_space<vmem>>, vector<128x128xbf16>
    %cst_14 = arith.constant dense<0.000000e+00> : vector<16x128xf32>
    %18 = tpu.matmul %16, %17, %cst_14 {dimension_numbers = #tpu.dot_dimension_numbers<[1], [0], [0], [1], [0, 0, 1, 1], [], []>} : vector<16x128xbf16>, vector<128x128xbf16>, vector<16x128xf32> -> vector<16x128xf32>
    %c0_15 = arith.constant 0 : index
    %c0_16 = arith.constant 0 : index
    %19 = vector.load %arg7[%c0_15, %c0_16] : memref<1x128xf32, #tpu.memory_space<vmem>>, vector<1x128xf32>
    %20 = vector.broadcast %19 : vector<1x128xf32> to vector<16x128xf32>
    %21 = arith.addf %18, %20 : vector<16x128xf32>
    %c0_17 = arith.constant 0 : index
    %c0_18 = arith.constant 0 : index
    %22 = vector.load %arg8[%c0_17, %c0_18] : memref<16x128xf32, #tpu.memory_space<vmem>>, vector<16x128xf32>
    tpu.vector_store %arg8[%c0_17, %c0_18], %21 {strides = array<i32>} : memref<16x128xf32, #tpu.memory_space<vmem>>, vector<16x128xf32>,
    return
  }
  func.func @transform_0(%arg0: i32) -> (i32, i32) {
    %c0_i32 = arith.constant 0 : i32
    %c0_i32_0 = arith.constant 0 : i32
    return %arg0, %c0_i32 : i32, i32
  }
  func.func @transform_1(%arg0: i32) -> (i32, i32) {
    %c0_i32 = arith.constant 0 : i32
    %c0_i32_0 = arith.constant 0 : i32
    %c0_i32_1 = arith.constant 0 : i32
    return %c0_i32, %c0_i32_0 : i32, i32
  }
  func.func @transform_2(%arg0: i32) -> (i32, i32) {
    %c0_i32 = arith.constant 0 : i32
    %c0_i32_0 = arith.constant 0 : i32
    %c0_i32_1 = arith.constant 0 : i32
    return %c0_i32, %c0_i32_0 : i32, i32
  }
  func.func @transform_3(%arg0: i32) -> (i32, i32) {
    %c0_i32 = arith.constant 0 : i32
    %c0_i32_0 = arith.constant 0 : i32
    %c0_i32_1 = arith.constant 0 : i32
    return %c0_i32, %c0_i32_0 : i32, i32
  }
  func.func @transform_4(%arg0: i32) -> (i32, i32) {
    %c0_i32 = arith.constant 0 : i32
    %c0_i32_0 = arith.constant 0 : i32
    %c0_i32_1 = arith.constant 0 : i32
    return %c0_i32, %c0_i32_0 : i32, i32
  }
  func.func @transform_5(%arg0: i32) -> (i32, i32) {
    %c0_i32 = arith.constant 0 : i32
    %c0_i32_0 = arith.constant 0 : i32
    %c0_i32_1 = arith.constant 0 : i32
    return %c0_i32, %c0_i32_0 : i32, i32
  }
  func.func @transform_6(%arg0: i32) -> (i32, i32) {
    %c0_i32 = arith.constant 0 : i32
    %c0_i32_0 = arith.constant 0 : i32
    %c0_i32_1 = arith.constant 0 : i32
    return %c0_i32, %c0_i32_0 : i32, i32
  }
  func.func @transform_7(%arg0: i32) -> (i32, i32) {
    %c0_i32 = arith.constant 0 : i32
    %c0_i32_0 = arith.constant 0 : i32
    return %arg0, %c0_i32 : i32, i32
  }
}

</mosaic_0001>

<llo_original>
// kernel: tpu_custom_call.1
$region0: #{tpu_custom_call.1}
  #allocation0 [shape = 'u32[]', space=smem, size = 0x4, offset = 0x4, fixed_abs, tag = 'smem constant byte address 0x4 - core index']
  #allocation1 [shape = 'u32[72,128]{1,0:T(1,128)}', space=vmem, size = 0x9000, scoped, tag = 'internal scratch']
  %s0 = inlined_call_operand.hbm [shape: bf16[16,896], index: 0, kind: input, shape index: {}]
  %s1 = inlined_call_operand.hbm [shape: bf16[896,512], index: 1, kind: input, shape index: {}]
  %s2 = inlined_call_operand.hbm [shape: f32[1,512], index: 2, kind: input, shape index: {}]
  %s3 = inlined_call_operand.hbm [shape: bf16[512,128], index: 3, kind: input, shape index: {}]
  %s4 = inlined_call_operand.vmem [shape: f32[1,128], index: 4, kind: input, shape index: {}]
  %s5 = inlined_call_operand.hbm [shape: bf16[128,128], index: 5, kind: input, shape index: {}]
  %s6 = inlined_call_operand.vmem [shape: f32[1,128], index: 6, kind: input, shape index: {}]
  %s7 = inlined_call_operand.hbm [shape: f32[16,128], index: 7, kind: output, shape index: {}]
  %s8 = sld [smem:[#allocation0]]
  $region58: #{tpu_custom_call.1} parent=0
    _
  %s10 = ssub.s32 1, %s8
  %s11 = scalar_select 0, %s10, %s8
  $region1: #{tpu_custom_call.1} parent=0
    #allocation2 [shape = 'u8[28672]{0}', space=vmem, size = 0x7000, scoped, tag = 'input window, operand 0, single buffered']
    #allocation3 [shape = 's32[1]{0}', space=sflag, size = 0x4, scoped, tag = 'scoped memory for tpu_custom_call.1']
    #allocation4 [shape = 's32[1]{0}', space=sflag, size = 0x4, scoped, tag = 'scoped memory for tpu_custom_call.1']
    #allocation5 [shape = 'u8[917504]{0}', space=vmem, size = 0xe0000, scoped, tag = 'input window, operand 1, single buffered']
    #allocation6 [shape = 's32[1]{0}', space=sflag, size = 0x4, scoped, tag = 'scoped memory for tpu_custom_call.1']
    #allocation7 [shape = 'u8[2048]{0}', space=vmem, size = 0x800, scoped, tag = 'input window, operand 2, single buffered']
    #allocation8 [shape = 'u8[131072]{0}', space=vmem, size = 0x20000, scoped, tag = 'input window, operand 3, single buffered']
    #allocation9 [shape = 's32[1]{0}', space=sflag, size = 0x4, scoped, tag = 'scoped memory for tpu_custom_call.1']
    #allocation10 [shape = 'u8[32768]{0}', space=vmem, size = 0x8000, scoped, tag = 'input window, operand 5, single buffered']
    #allocation11 [shape = 'u8[8192]{0}', space=vmem, size = 0x2000, scoped, tag = 'output window, operand 0, single buffered']
    %12 = vsyncpa [#allocation3], 0
    %13 = vsyncpa [#allocation6], 0
    %14 = vsyncpa [#allocation9], 0
    %15 = vsyncpa [#allocation4], 0
    // Predicated region
    $region2: #{tpu_custom_call.1} parent=1 // pred_check
      _
    $region3: #{tpu_custom_call.1} parent=1 // pred_check_branch
      %17 = sbr.rel (0) target = $region5
    $region4: #{tpu_custom_call.1} parent=1 // pred_region
      %19 = vsyncadd [#allocation3], 0
      %s20 = sshll.u32 %s0, 4
      %s21 = int_to_ptr.hbm [resolvable:$true] %s20
      %s22 = sshll.u32 [#allocation2], 4
      %s23 = int_to_ptr.vmem [resolvable:$true] %s22
      %28 = dma.hbm_to_vmem [thread:$0]  %s21, 896, %s23, [#allocation3], 448, 448, 28
    $region5: #{tpu_custom_call.1} parent=1 // pred_fallthru
      _
    // Predicated region
    $region6: #{tpu_custom_call.1} parent=1 // pred_check
      _
    $region7: #{tpu_custom_call.1} parent=1 // pred_check_branch
      %30 = sbr.rel (0) target = $region9
    $region8: #{tpu_custom_call.1} parent=1 // pred_region
      %32 = vsyncadd [#allocation6], 0
      %s33 = sshll.u32 %s1, 4
      %s34 = int_to_ptr.hbm [resolvable:$true] %s33
      %s35 = sshll.u32 [#allocation5], 4
      %s36 = int_to_ptr.vmem [resolvable:$true] %s35
      %41 = dma.hbm_to_vmem [thread:$0]  %s34, 28672, %s36, [#allocation6], 256, 256, 16
    $region9: #{tpu_custom_call.1} parent=1 // pred_fallthru
      _
    // Predicated region
    $region10: #{tpu_custom_call.1} parent=1 // pred_check
      _
    $region11: #{tpu_custom_call.1} parent=1 // pred_check_branch
      %43 = sbr.rel (0) target = $region13
    $region12: #{tpu_custom_call.1} parent=1 // pred_region
      %45 = vsyncadd [#allocation6], 0
      %s47 = sshll.u32 %s2, 4
      %s48 = int_to_ptr.hbm [resolvable:$true] %s47
      %s49 = sshll.u32 [#allocation7], 4
      %s50 = int_to_ptr.vmem [resolvable:$true] %s49
      %52 = dma.hbm_to_vmem [thread:$0]  %s48, 64, %s50, [#allocation6]
    $region13: #{tpu_custom_call.1} parent=1 // pred_fallthru
      _
    // Predicated region
    $region14: #{tpu_custom_call.1} parent=1 // pred_check
      _
    $region15: #{tpu_custom_call.1} parent=1 // pred_check_branch
      %54 = sbr.rel (0) target = $region17
    $region16: #{tpu_custom_call.1} parent=1 // pred_region
      %56 = vsyncadd [#allocation9], 0
      %s57 = sshll.u32 %s3, 4
      %s58 = int_to_ptr.hbm [resolvable:$true] %s57
      %s59 = sshll.u32 [#allocation8], 4
      %s60 = int_to_ptr.vmem [resolvable:$true] %s59
      %65 = dma.hbm_to_vmem [thread:$0]  %s58, 4096, %s60, [#allocation9], 64, 64, 4
    $region17: #{tpu_custom_call.1} parent=1 // pred_fallthru
      _
    // Predicated region
    $region18: #{tpu_custom_call.1} parent=1 // pred_check
      _
    $region19: #{tpu_custom_call.1} parent=1 // pred_check_branch
      %67 = sbr.rel (0) target = $region21
    $region20: #{tpu_custom_call.1} parent=1 // pred_region
      _
    $region21: #{tpu_custom_call.1} parent=1 // pred_fallthru
      _
    // Predicated region
    $region22: #{tpu_custom_call.1} parent=1 // pred_check
      _
    $region23: #{tpu_custom_call.1} parent=1 // pred_check_branch
      %69 = sbr.rel (0) target = $region25
    $region24: #{tpu_custom_call.1} parent=1 // pred_region
      %71 = vsyncadd [#allocation9], 0
      %s72 = sshll.u32 %s5, 4
      %s73 = int_to_ptr.hbm [resolvable:$true] %s72
      %s74 = sshll.u32 [#allocation10], 4
      %s75 = int_to_ptr.vmem [resolvable:$true] %s74
      %80 = dma.hbm_to_vmem [thread:$0]  %s73, 1024, %s75, [#allocation9], 64, 64, 4
    $region25: #{tpu_custom_call.1} parent=1 // pred_fallthru
      _
    // Predicated region
    $region26: #{tpu_custom_call.1} parent=1 // pred_check
      _
    $region27: #{tpu_custom_call.1} parent=1 // pred_check_branch
      %82 = sbr.rel (0) target = $region29
    $region28: #{tpu_custom_call.1} parent=1 // pred_region
      _
    $region29: #{tpu_custom_call.1} parent=1 // pred_fallthru
      _
    // Predicated region
    $region30: #{tpu_custom_call.1} parent=1 // pred_check
      _
    $region31: #{tpu_custom_call.1} parent=1 // pred_check_branch
      %84 = sbr.rel (0) target = $region33
    $region32: #{tpu_custom_call.1} parent=1 // pred_region
      %86 = dma.done [#allocation3], 896
    $region33: #{tpu_custom_call.1} parent=1 // pred_fallthru
      _
    // Predicated region
    $region34: #{tpu_custom_call.1} parent=1 // pred_check
      _
    $region35: #{tpu_custom_call.1} parent=1 // pred_check_branch
      %88 = sbr.rel (0) target = $region37
    $region36: #{tpu_custom_call.1} parent=1 // pred_region
      %90 = dma.done [#allocation6], 28672
    $region37: #{tpu_custom_call.1} parent=1 // pred_fallthru
      _
    // Predicated region
    $region38: #{tpu_custom_call.1} parent=1 // pred_check
      _
    $region39: #{tpu_custom_call.1} parent=1 // pred_check_branch
      %92 = sbr.rel (0) target = $region41
    $region40: #{tpu_custom_call.1} parent=1 // pred_region
      %94 = dma.done [#allocation6], 64
    $region41: #{tpu_custom_call.1} parent=1 // pred_fallthru
      _
    // Predicated region
    $region42: #{tpu_custom_call.1} parent=1 // pred_check
      _
    $region43: #{tpu_custom_call.1} parent=1 // pred_check_branch
      %96 = sbr.rel (0) target = $region45
    $region44: #{tpu_custom_call.1} parent=1 // pred_region
      %98 = dma.done [#allocation9], 4096
    $region45: #{tpu_custom_call.1} parent=1 // pred_fallthru
      _
    // Predicated region
    $region46: #{tpu_custom_call.1} parent=1 // pred_check
      _
    $region47: #{tpu_custom_call.1} parent=1 // pred_check_branch
      %100 = sbr.rel (0) target = $region49
    $region48: #{tpu_custom_call.1} parent=1 // pred_region
      %102 = dma.done [#allocation9], 1024
    $region49: #{tpu_custom_call.1} parent=1 // pred_fallthru
      _
    %v103 = vld [vmem:[#allocation2] sm:$0xff]
    %v104 = vld [vmem:[#allocation2 + $0x8] sm:$0xff]
    %v105 = vld [vmem:[#allocation2 + $0x10] sm:$0xff]
    %v106 = vld [vmem:[#allocation2 + $0x18] sm:$0xf]
    %v107 = vld [vmem:[#allocation2 + $0x1c] sm:$0xff]
    %v108 = vld [vmem:[#allocation2 + $0x24] sm:$0xff]
    %v109 = vld [vmem:[#allocation2 + $0x2c] sm:$0xff]
    %v110 = vld [vmem:[#allocation2 + $0x34] sm:$0xf]
    %v111 = vld [vmem:[#allocation5] sm:$0xff]
    %v112 = vld [vmem:[#allocation5 + $0x8] sm:$0xff]
    %v113 = vld [vmem:[#allocation5 + $0x10] sm:$0xff]
    %v114 = vld [vmem:[#allocation5 + $0x18] sm:$0xff]
    %v115 = vld [vmem:[#allocation5 + $0x20] sm:$0xff]
    %v116 = vld [vmem:[#allocation5 + $0x28] sm:$0xff]
    %v117 = vld [vmem:[#allocation5 + $0x30] sm:$0xff]
    %v118 = vld [vmem:[#allocation5 + $0x38] sm:$0xff]
    %v119 = vld [vmem:[#allocation5 + $0x40] sm:$0xff]
    %v120 = vld [vmem:[#allocation5 + $0x48] sm:$0xff]
    %v121 = vld [vmem:[#allocation5 + $0x50] sm:$0xff]
    %v122 = vld [vmem:[#allocation5 + $0x58] sm:$0xff]
    %v123 = vld [vmem:[#allocation5 + $0x60] sm:$0xff]
    %v124 = vld [vmem:[#allocation5 + $0x68] sm:$0xff]
    %v125 = vld [vmem:[#allocation5 + $0x70] sm:$0xff]
    %v126 = vld [vmem:[#allocation5 + $0x78] sm:$0xff]
    %v127 = vld [vmem:[#allocation5 + $0x80] sm:$0xff]
    %v128 = vld [vmem:[#allocation5 + $0x88] sm:$0xff]
    %v129 = vld [vmem:[#allocation5 + $0x90] sm:$0xff]
    %v130 = vld [vmem:[#allocation5 + $0x98] sm:$0xff]
    %v131 = vld [vmem:[#allocation5 + $0xa0] sm:$0xff]
    %v132 = vld [vmem:[#allocation5 + $0xa8] sm:$0xff]
    %v133 = vld [vmem:[#allocation5 + $0xb0] sm:$0xff]
    %v134 = vld [vmem:[#allocation5 + $0xb8] sm:$0xff]
    %v135 = vld [vmem:[#allocation5 + $0xc0] sm:$0xff]
    %v136 = vld [vmem:[#allocation5 + $0xc8] sm:$0xff]
    %v137 = vld [vmem:[#allocation5 + $0xd0] sm:$0xff]
    %v138 = vld [vmem:[#allocation5 + $0xd8] sm:$0xff]
    %v139 = vld [vmem:[#allocation5 + $0xe0] sm:$0xff]
    %v140 = vld [vmem:[#allocation5 + $0xe8] sm:$0xff]
    %v141 = vld [vmem:[#allocation5 + $0xf0] sm:$0xff]
    %v142 = vld [vmem:[#allocation5 + $0xf8] sm:$0xff]
    %v143 = vld [vmem:[#allocation5 + $0x100] sm:$0xff]
    %v144 = vld [vmem:[#allocation5 + $0x108] sm:$0xff]
    %v145 = vld [vmem:[#allocation5 + $0x110] sm:$0xff]
    %v146 = vld [vmem:[#allocation5 + $0x118] sm:$0xff]
    %v147 = vld [vmem:[#allocation5 + $0x120] sm:$0xff]
    %v148 = vld [vmem:[#allocation5 + $0x128] sm:$0xff]
    %v149 = vld [vmem:[#allocation5 + $0x130] sm:$0xff]
    %v150 = vld [vmem:[#allocation5 + $0x138] sm:$0xff]
    %v151 = vld [vmem:[#allocation5 + $0x140] sm:$0xff]
    %v152 = vld [vmem:[#allocation5 + $0x148] sm:$0xff]
    %v153 = vld [vmem:[#allocation5 + $0x150] sm:$0xff]
    %v154 = vld [vmem:[#allocation5 + $0x158] sm:$0xff]
    %v155 = vld [vmem:[#allocation5 + $0x160] sm:$0xff]
    %v156 = vld [vmem:[#allocation5 + $0x168] sm:$0xff]
    %v157 = vld [vmem:[#allocation5 + $0x170] sm:$0xff]
    %v158 = vld [vmem:[#allocation5 + $0x178] sm:$0xff]
    %v159 = vld [vmem:[#allocation5 + $0x180] sm:$0xff]
    %v160 = vld [vmem:[#allocation5 + $0x188] sm:$0xff]
    %v161 = vld [vmem:[#allocation5 + $0x190] sm:$0xff]
    %v162 = vld [vmem:[#allocation5 + $0x198] sm:$0xff]
    %v163 = vld [vmem:[#allocation5 + $0x1a0] sm:$0xff]
    %v164 = vld [vmem:[#allocation5 + $0x1a8] sm:$0xff]
    %v165 = vld [vmem:[#allocation5 + $0x1b0] sm:$0xff]
    %v166 = vld [vmem:[#allocation5 + $0x1b8] sm:$0xff]
    %v167 = vld [vmem:[#allocation5 + $0x1c0] sm:$0xff]
    %v168 = vld [vmem:[#allocation5 + $0x1c8] sm:$0xff]
    %v169 = vld [vmem:[#allocation5 + $0x1d0] sm:$0xff]
    %v170 = vld [vmem:[#allocation5 + $0x1d8] sm:$0xff]
    %v171 = vld [vmem:[#allocation5 + $0x1e0] sm:$0xff]
    %v172 = vld [vmem:[#allocation5 + $0x1e8] sm:$0xff]
    %v173 = vld [vmem:[#allocation5 + $0x1f0] sm:$0xff]
    %v174 = vld [vmem:[#allocation5 + $0x1f8] sm:$0xff]
    %v175 = vld [vmem:[#allocation5 + $0x200] sm:$0xff]
    %v176 = vld [vmem:[#allocation5 + $0x208] sm:$0xff]
    %v177 = vld [vmem:[#allocation5 + $0x210] sm:$0xff]
    %v178 = vld [vmem:[#allocation5 + $0x218] sm:$0xff]
    %v179 = vld [vmem:[#allocation5 + $0x220] sm:$0xff]
    %v180 = vld [vmem:[#allocation5 + $0x228] sm:$0xff]
    %v181 = vld [vmem:[#allocation5 + $0x230] sm:$0xff]
    %v182 = vld [vmem:[#allocation5 + $0x238] sm:$0xff]
    %v183 = vld [vmem:[#allocation5 + $0x240] sm:$0xff]
    %v184 = vld [vmem:[#allocation5 + $0x248] sm:$0xff]
    %v185 = vld [vmem:[#allocation5 + $0x250] sm:$0xff]
    %v186 = vld [vmem:[#allocation5 + $0x258] sm:$0xff]
    %v187 = vld [vmem:[#allocation5 + $0x260] sm:$0xff]
    %v188 = vld [vmem:[#allocation5 + $0x268] sm:$0xff]
    %v189 = vld [vmem:[#allocation5 + $0x270] sm:$0xff]
    %v190 = vld [vmem:[#allocation5 + $0x278] sm:$0xff]
    %v191 = vld [vmem:[#allocation5 + $0x280] sm:$0xff]
    %v192 = vld [vmem:[#allocation5 + $0x288] sm:$0xff]
    %v193 = vld [vmem:[#allocation5 + $0x290] sm:$0xff]
    %v194 = vld [vmem:[#allocation5 + $0x298] sm:$0xff]
    %v195 = vld [vmem:[#allocation5 + $0x2a0] sm:$0xff]
    %v196 = vld [vmem:[#allocation5 + $0x2a8] sm:$0xff]
    %v197 = vld [vmem:[#allocation5 + $0x2b0] sm:$0xff]
    %v198 = vld [vmem:[#allocation5 + $0x2b8] sm:$0xff]
    %v199 = vld [vmem:[#allocation5 + $0x2c0] sm:$0xff]
    %v200 = vld [vmem:[#allocation5 + $0x2c8] sm:$0xff]
    %v201 = vld [vmem:[#allocation5 + $0x2d0] sm:$0xff]
    %v202 = vld [vmem:[#allocation5 + $0x2d8] sm:$0xff]
    %v203 = vld [vmem:[#allocation5 + $0x2e0] sm:$0xff]
    %v204 = vld [vmem:[#allocation5 + $0x2e8] sm:$0xff]
    %v205 = vld [vmem:[#allocation5 + $0x2f0] sm:$0xff]
    %v206 = vld [vmem:[#allocation5 + $0x2f8] sm:$0xff]
    %v207 = vld [vmem:[#allocation5 + $0x300] sm:$0xff]
    %v208 = vld [vmem:[#allocation5 + $0x308] sm:$0xff]
    %v209 = vld [vmem:[#allocation5 + $0x310] sm:$0xff]
    %v210 = vld [vmem:[#allocation5 + $0x318] sm:$0xff]
    %v211 = vld [vmem:[#allocation5 + $0x320] sm:$0xff]
    %v212 = vld [vmem:[#allocation5 + $0x328] sm:$0xff]
    %v213 = vld [vmem:[#allocation5 + $0x330] sm:$0xff]
    %v214 = vld [vmem:[#allocation5 + $0x338] sm:$0xff]
    %v215 = vld [vmem:[#allocation5 + $0x340] sm:$0xff]
    %v216 = vld [vmem:[#allocation5 + $0x348] sm:$0xff]
    %v217 = vld [vmem:[#allocation5 + $0x350] sm:$0xff]
    %v218 = vld [vmem:[#allocation5 + $0x358] sm:$0xff]
    %v219 = vld [vmem:[#allocation5 + $0x360] sm:$0xff]
    %v220 = vld [vmem:[#allocation5 + $0x368] sm:$0xff]
    %v221 = vld [vmem:[#allocation5 + $0x370] sm:$0xff]
    %v222 = vld [vmem:[#allocation5 + $0x378] sm:$0xff]
    %v223 = vld [vmem:[#allocation5 + $0x380] sm:$0xff]
    %v224 = vld [vmem:[#allocation5 + $0x388] sm:$0xff]
    %v225 = vld [vmem:[#allocation5 + $0x390] sm:$0xff]
    %v226 = vld [vmem:[#allocation5 + $0x398] sm:$0xff]
    %v227 = vld [vmem:[#allocation5 + $0x3a0] sm:$0xff]
    %v228 = vld [vmem:[#allocation5 + $0x3a8] sm:$0xff]
    %v229 = vld [vmem:[#allocation5 + $0x3b0] sm:$0xff]
    %v230 = vld [vmem:[#allocation5 + $0x3b8] sm:$0xff]
    %v231 = vld [vmem:[#allocation5 + $0x3c0] sm:$0xff]
    %v232 = vld [vmem:[#allocation5 + $0x3c8] sm:$0xff]
    %v233 = vld [vmem:[#allocation5 + $0x3d0] sm:$0xff]
    %v234 = vld [vmem:[#allocation5 + $0x3d8] sm:$0xff]
    %v235 = vld [vmem:[#allocation5 + $0x3e0] sm:$0xff]
    %v236 = vld [vmem:[#allocation5 + $0x3e8] sm:$0xff]
    %v237 = vld [vmem:[#allocation5 + $0x3f0] sm:$0xff]
    %v238 = vld [vmem:[#allocation5 + $0x3f8] sm:$0xff]
    %v239 = vld [vmem:[#allocation5 + $0x400] sm:$0xff]
    %v240 = vld [vmem:[#allocation5 + $0x408] sm:$0xff]
    %v241 = vld [vmem:[#allocation5 + $0x410] sm:$0xff]
    %v242 = vld [vmem:[#allocation5 + $0x418] sm:$0xff]
    %v243 = vld [vmem:[#allocation5 + $0x420] sm:$0xff]
    %v244 = vld [vmem:[#allocation5 + $0x428] sm:$0xff]
    %v245 = vld [vmem:[#allocation5 + $0x430] sm:$0xff]
    %v246 = vld [vmem:[#allocation5 + $0x438] sm:$0xff]
    %v247 = vld [vmem:[#allocation5 + $0x440] sm:$0xff]
    %v248 = vld [vmem:[#allocation5 + $0x448] sm:$0xff]
    %v249 = vld [vmem:[#allocation5 + $0x450] sm:$0xff]
    %v250 = vld [vmem:[#allocation5 + $0x458] sm:$0xff]
    %v251 = vld [vmem:[#allocation5 + $0x460] sm:$0xff]
    %v252 = vld [vmem:[#allocation5 + $0x468] sm:$0xff]
    %v253 = vld [vmem:[#allocation5 + $0x470] sm:$0xff]
    %v254 = vld [vmem:[#allocation5 + $0x478] sm:$0xff]
    %v255 = vld [vmem:[#allocation5 + $0x480] sm:$0xff]
    %v256 = vld [vmem:[#allocation5 + $0x488] sm:$0xff]
    %v257 = vld [vmem:[#allocation5 + $0x490] sm:$0xff]
    %v258 = vld [vmem:[#allocation5 + $0x498] sm:$0xff]
    %v259 = vld [vmem:[#allocation5 + $0x4a0] sm:$0xff]
    %v260 = vld [vmem:[#allocation5 + $0x4a8] sm:$0xff]
    %v261 = vld [vmem:[#allocation5 + $0x4b0] sm:$0xff]
    %v262 = vld [vmem:[#allocation5 + $0x4b8] sm:$0xff]
    %v263 = vld [vmem:[#allocation5 + $0x4c0] sm:$0xff]
    %v264 = vld [vmem:[#allocation5 + $0x4c8] sm:$0xff]
    %v265 = vld [vmem:[#allocation5 + $0x4d0] sm:$0xff]
    %v266 = vld [vmem:[#allocation5 + $0x4d8] sm:$0xff]
    %v267 = vld [vmem:[#allocation5 + $0x4e0] sm:$0xff]
    %v268 = vld [vmem:[#allocation5 + $0x4e8] sm:$0xff]
    %v269 = vld [vmem:[#allocation5 + $0x4f0] sm:$0xff]
    %v270 = vld [vmem:[#allocation5 + $0x4f8] sm:$0xff]
    %v271 = vld [vmem:[#allocation5 + $0x500] sm:$0xff]
    %v272 = vld [vmem:[#allocation5 + $0x508] sm:$0xff]
    %v273 = vld [vmem:[#allocation5 + $0x510] sm:$0xff]
    %v274 = vld [vmem:[#allocation5 + $0x518] sm:$0xff]
    %v275 = vld [vmem:[#allocation5 + $0x520] sm:$0xff]
    %v276 = vld [vmem:[#allocation5 + $0x528] sm:$0xff]
    %v277 = vld [vmem:[#allocation5 + $0x530] sm:$0xff]
    %v278 = vld [vmem:[#allocation5 + $0x538] sm:$0xff]
    %v279 = vld [vmem:[#allocation5 + $0x540] sm:$0xff]
    %v280 = vld [vmem:[#allocation5 + $0x548] sm:$0xff]
    %v281 = vld [vmem:[#allocation5 + $0x550] sm:$0xff]
    %v282 = vld [vmem:[#allocation5 + $0x558] sm:$0xff]
    %v283 = vld [vmem:[#allocation5 + $0x560] sm:$0xff]
    %v284 = vld [vmem:[#allocation5 + $0x568] sm:$0xff]
    %v285 = vld [vmem:[#allocation5 + $0x570] sm:$0xff]
    %v286 = vld [vmem:[#allocation5 + $0x578] sm:$0xff]
    %v287 = vld [vmem:[#allocation5 + $0x580] sm:$0xff]
    %v288 = vld [vmem:[#allocation5 + $0x588] sm:$0xff]
    %v289 = vld [vmem:[#allocation5 + $0x590] sm:$0xff]
    %v290 = vld [vmem:[#allocation5 + $0x598] sm:$0xff]
    %v291 = vld [vmem:[#allocation5 + $0x5a0] sm:$0xff]
    %v292 = vld [vmem:[#allocation5 + $0x5a8] sm:$0xff]
    %v293 = vld [vmem:[#allocation5 + $0x5b0] sm:$0xff]
    %v294 = vld [vmem:[#allocation5 + $0x5b8] sm:$0xff]
    %v295 = vld [vmem:[#allocation5 + $0x5c0] sm:$0xff]
    %v296 = vld [vmem:[#allocation5 + $0x5c8] sm:$0xff]
    %v297 = vld [vmem:[#allocation5 + $0x5d0] sm:$0xff]
    %v298 = vld [vmem:[#allocation5 + $0x5d8] sm:$0xff]
    %v299 = vld [vmem:[#allocation5 + $0x5e0] sm:$0xff]
    %v300 = vld [vmem:[#allocation5 + $0x5e8] sm:$0xff]
    %v301 = vld [vmem:[#allocation5 + $0x5f0] sm:$0xff]
    %v302 = vld [vmem:[#allocation5 + $0x5f8] sm:$0xff]
    %v303 = vld [vmem:[#allocation5 + $0x600] sm:$0xff]
    %v304 = vld [vmem:[#allocation5 + $0x608] sm:$0xff]
    %v305 = vld [vmem:[#allocation5 + $0x610] sm:$0xff]
    %v306 = vld [vmem:[#allocation5 + $0x618] sm:$0xff]
    %v307 = vld [vmem:[#allocation5 + $0x620] sm:$0xff]
    %v308 = vld [vmem:[#allocation5 + $0x628] sm:$0xff]
    %v309 = vld [vmem:[#allocation5 + $0x630] sm:$0xff]
    %v310 = vld [vmem:[#allocation5 + $0x638] sm:$0xff]
    %v311 = vld [vmem:[#allocation5 + $0x640] sm:$0xff]
    %v312 = vld [vmem:[#allocation5 + $0x648] sm:$0xff]
    %v313 = vld [vmem:[#allocation5 + $0x650] sm:$0xff]
    %v314 = vld [vmem:[#allocation5 + $0x658] sm:$0xff]
    %v315 = vld [vmem:[#allocation5 + $0x660] sm:$0xff]
    %v316 = vld [vmem:[#allocation5 + $0x668] sm:$0xff]
    %v317 = vld [vmem:[#allocation5 + $0x670] sm:$0xff]
    %v318 = vld [vmem:[#allocation5 + $0x678] sm:$0xff]
    %v319 = vld [vmem:[#allocation5 + $0x680] sm:$0xff]
    %v320 = vld [vmem:[#allocation5 + $0x688] sm:$0xff]
    %v321 = vld [vmem:[#allocation5 + $0x690] sm:$0xff]
    %v322 = vld [vmem:[#allocation5 + $0x698] sm:$0xff]
    %v323 = vld [vmem:[#allocation5 + $0x6a0] sm:$0xff]
    %v324 = vld [vmem:[#allocation5 + $0x6a8] sm:$0xff]
    %v325 = vld [vmem:[#allocation5 + $0x6b0] sm:$0xff]
    %v326 = vld [vmem:[#allocation5 + $0x6b8] sm:$0xff]
    %v327 = vld [vmem:[#allocation5 + $0x6c0] sm:$0xff]
    %v328 = vld [vmem:[#allocation5 + $0x6c8] sm:$0xff]
    %v329 = vld [vmem:[#allocation5 + $0x6d0] sm:$0xff]
    %v330 = vld [vmem:[#allocation5 + $0x6d8] sm:$0xff]
    %v331 = vld [vmem:[#allocation5 + $0x6e0] sm:$0xff]
    %v332 = vld [vmem:[#allocation5 + $0x6e8] sm:$0xff]
    %v333 = vld [vmem:[#allocation5 + $0x6f0] sm:$0xff]
    %v334 = vld [vmem:[#allocation5 + $0x6f8] sm:$0xff]
    %v335 = vld [vmem:[#allocation7] sm:$0xf]
    %v337 = vperm.slane %v335, 0
    %v338 = vperm.slane %v335, 1
    %v339 = vperm.slane %v335, 2
    %v340 = vperm.slane %v335, 3
    %v353 = vunpack.c.l.b16 %v103
    %v354 = vunpack.c.h.b16 %v103
    %v355 = vunpack.c.l.b16 %v104
    %v356 = vunpack.c.h.b16 %v104
    %v357 = vunpack.c.l.b16 %v105
    %v358 = vunpack.c.h.b16 %v105
    %v359 = vunpack.c.l.b16 %v106
    %v360 = vunpack.c.l.b16 %v107
    %v361 = vunpack.c.h.b16 %v107
    %v362 = vunpack.c.l.b16 %v108
    %v363 = vunpack.c.h.b16 %v108
    %v364 = vunpack.c.l.b16 %v109
    %v365 = vunpack.c.h.b16 %v109
    %v366 = vunpack.c.l.b16 %v110
    %v367 = vpack.c.b16 %v360, %v353
    %v368 = vpack.c.b16 %v361, %v354
    %v369 = vpack.c.b16 %v362, %v355
    %v370 = vpack.c.b16 %v363, %v356
    %v371 = vpack.c.b16 %v364, %v357
    %v372 = vpack.c.b16 %v365, %v358
    %v373 = vpack.c.b16 %v366, %v359
    %v605 = vunpack.c.l.b16 %v111
    %v606 = vunpack.c.h.b16 %v111
    %v607 = vunpack.c.l.b16 %v112
    %v608 = vunpack.c.h.b16 %v112
    %v609 = vunpack.c.l.b16 %v113
    %v610 = vunpack.c.h.b16 %v113
    %v611 = vunpack.c.l.b16 %v114
    %v612 = vunpack.c.h.b16 %v114
    %v613 = vunpack.c.l.b16 %v115
    %v614 = vunpack.c.h.b16 %v115
    %v615 = vunpack.c.l.b16 %v116
    %v616 = vunpack.c.h.b16 %v116
    %v617 = vunpack.c.l.b16 %v117
    %v618 = vunpack.c.h.b16 %v117
    %v619 = vunpack.c.l.b16 %v118
    %v620 = vunpack.c.h.b16 %v118
    %v621 = vunpack.c.l.b16 %v119
    %v622 = vunpack.c.h.b16 %v119
    %v623 = vunpack.c.l.b16 %v120
    %v624 = vunpack.c.h.b16 %v120
    %v625 = vunpack.c.l.b16 %v121
    %v626 = vunpack.c.h.b16 %v121
    %v627 = vunpack.c.l.b16 %v122
    %v628 = vunpack.c.h.b16 %v122
    %v629 = vunpack.c.l.b16 %v123
    %v630 = vunpack.c.h.b16 %v123
    %v631 = vunpack.c.l.b16 %v124
    %v632 = vunpack.c.h.b16 %v124
    %v633 = vunpack.c.l.b16 %v125
    %v634 = vunpack.c.h.b16 %v125
    %v635 = vunpack.c.l.b16 %v126
    %v636 = vunpack.c.h.b16 %v126
    %v637 = vunpack.c.l.b16 %v127
    %v638 = vunpack.c.h.b16 %v127
    %v639 = vunpack.c.l.b16 %v128
    %v640 = vunpack.c.h.b16 %v128
    %v641 = vunpack.c.l.b16 %v129
    %v642 = vunpack.c.h.b16 %v129
    %v643 = vunpack.c.l.b16 %v130
    %v644 = vunpack.c.h.b16 %v130
    %v645 = vunpack.c.l.b16 %v131
    %v646 = vunpack.c.h.b16 %v131
    %v647 = vunpack.c.l.b16 %v132
    %v648 = vunpack.c.h.b16 %v132
    %v649 = vunpack.c.l.b16 %v133
    %v650 = vunpack.c.h.b16 %v133
    %v651 = vunpack.c.l.b16 %v134
    %v652 = vunpack.c.h.b16 %v134
    %v653 = vunpack.c.l.b16 %v135
    %v654 = vunpack.c.h.b16 %v135
    %v655 = vunpack.c.l.b16 %v136
    %v656 = vunpack.c.h.b16 %v136
    %v657 = vunpack.c.l.b16 %v137
    %v658 = vunpack.c.h.b16 %v137
    %v659 = vunpack.c.l.b16 %v138
    %v660 = vunpack.c.h.b16 %v138
    %v661 = vunpack.c.l.b16 %v139
    %v662 = vunpack.c.h.b16 %v139
    %v663 = vunpack.c.l.b16 %v140
    %v664 = vunpack.c.h.b16 %v140
    %v665 = vunpack.c.l.b16 %v141
    %v666 = vunpack.c.h.b16 %v141
    %v667 = vunpack.c.l.b16 %v142
    %v668 = vunpack.c.h.b16 %v142
    %v669 = vunpack.c.l.b16 %v143
    %v670 = vunpack.c.h.b16 %v143
    %v671 = vunpack.c.l.b16 %v144
    %v672 = vunpack.c.h.b16 %v144
    %v673 = vunpack.c.l.b16 %v145
    %v674 = vunpack.c.h.b16 %v145
    %v675 = vunpack.c.l.b16 %v146
    %v676 = vunpack.c.h.b16 %v146
    %v677 = vunpack.c.l.b16 %v147
    %v678 = vunpack.c.h.b16 %v147
    %v679 = vunpack.c.l.b16 %v148
    %v680 = vunpack.c.h.b16 %v148
    %v681 = vunpack.c.l.b16 %v149
    %v682 = vunpack.c.h.b16 %v149
    %v683 = vunpack.c.l.b16 %v150
    %v684 = vunpack.c.h.b16 %v150
    %v685 = vunpack.c.l.b16 %v151
    %v686 = vunpack.c.h.b16 %v151
    %v687 = vunpack.c.l.b16 %v152
    %v688 = vunpack.c.h.b16 %v152
    %v689 = vunpack.c.l.b16 %v153
    %v690 = vunpack.c.h.b16 %v153
    %v691 = vunpack.c.l.b16 %v154
    %v692 = vunpack.c.h.b16 %v154
    %v693 = vunpack.c.l.b16 %v155
    %v694 = vunpack.c.h.b16 %v155
    %v695 = vunpack.c.l.b16 %v156
    %v696 = vunpack.c.h.b16 %v156
    %v697 = vunpack.c.l.b16 %v157
    %v698 = vunpack.c.h.b16 %v157
    %v699 = vunpack.c.l.b16 %v158
    %v700 = vunpack.c.h.b16 %v158
    %v701 = vunpack.c.l.b16 %v159
    %v702 = vunpack.c.h.b16 %v159
    %v703 = vunpack.c.l.b16 %v160
    %v704 = vunpack.c.h.b16 %v160
    %v705 = vunpack.c.l.b16 %v161
    %v706 = vunpack.c.h.b16 %v161
    %v707 = vunpack.c.l.b16 %v162
    %v708 = vunpack.c.h.b16 %v162
    %v709 = vunpack.c.l.b16 %v163
    %v710 = vunpack.c.h.b16 %v163
    %v711 = vunpack.c.l.b16 %v164
    %v712 = vunpack.c.h.b16 %v164
    %v713 = vunpack.c.l.b16 %v165
    %v714 = vunpack.c.h.b16 %v165
    %v715 = vunpack.c.l.b16 %v166
    %v716 = vunpack.c.h.b16 %v166
    %v717 = vunpack.c.l.b16 %v167
    %v718 = vunpack.c.h.b16 %v167
    %v719 = vunpack.c.l.b16 %v168
    %v720 = vunpack.c.h.b16 %v168
    %v721 = vunpack.c.l.b16 %v169
    %v722 = vunpack.c.h.b16 %v169
    %v723 = vunpack.c.l.b16 %v170
    %v724 = vunpack.c.h.b16 %v170
    %v725 = vunpack.c.l.b16 %v171
    %v726 = vunpack.c.h.b16 %v171
    %v727 = vunpack.c.l.b16 %v172
    %v728 = vunpack.c.h.b16 %v172
    %v729 = vunpack.c.l.b16 %v173
    %v730 = vunpack.c.h.b16 %v173
    %v731 = vunpack.c.l.b16 %v174
    %v732 = vunpack.c.h.b16 %v174
    %v733 = vunpack.c.l.b16 %v175
    %v734 = vunpack.c.h.b16 %v175
    %v735 = vunpack.c.l.b16 %v176
    %v736 = vunpack.c.h.b16 %v176
    %v737 = vunpack.c.l.b16 %v177
    %v738 = vunpack.c.h.b16 %v177
    %v739 = vunpack.c.l.b16 %v178
    %v740 = vunpack.c.h.b16 %v178
    %v741 = vunpack.c.l.b16 %v179
    %v742 = vunpack.c.h.b16 %v179
    %v743 = vunpack.c.l.b16 %v180
    %v744 = vunpack.c.h.b16 %v180
    %v745 = vunpack.c.l.b16 %v181
    %v746 = vunpack.c.h.b16 %v181
    %v747 = vunpack.c.l.b16 %v182
    %v748 = vunpack.c.h.b16 %v182
    %v749 = vunpack.c.l.b16 %v183
    %v750 = vunpack.c.h.b16 %v183
    %v751 = vunpack.c.l.b16 %v184
    %v752 = vunpack.c.h.b16 %v184
    %v753 = vunpack.c.l.b16 %v185
    %v754 = vunpack.c.h.b16 %v185
    %v755 = vunpack.c.l.b16 %v186
    %v756 = vunpack.c.h.b16 %v186
    %v757 = vunpack.c.l.b16 %v187
    %v758 = vunpack.c.h.b16 %v187
    %v759 = vunpack.c.l.b16 %v188
    %v760 = vunpack.c.h.b16 %v188
    %v761 = vunpack.c.l.b16 %v189
    %v762 = vunpack.c.h.b16 %v189
    %v763 = vunpack.c.l.b16 %v190
    %v764 = vunpack.c.h.b16 %v190
    %v765 = vunpack.c.l.b16 %v191
    %v766 = vunpack.c.h.b16 %v191
    %v767 = vunpack.c.l.b16 %v192
    %v768 = vunpack.c.h.b16 %v192
    %v769 = vunpack.c.l.b16 %v193
    %v770 = vunpack.c.h.b16 %v193
    %v771 = vunpack.c.l.b16 %v194
    %v772 = vunpack.c.h.b16 %v194
    %v773 = vunpack.c.l.b16 %v195
    %v774 = vunpack.c.h.b16 %v195
    %v775 = vunpack.c.l.b16 %v196
    %v776 = vunpack.c.h.b16 %v196
    %v777 = vunpack.c.l.b16 %v197
    %v778 = vunpack.c.h.b16 %v197
    %v779 = vunpack.c.l.b16 %v198
    %v780 = vunpack.c.h.b16 %v198
    %v781 = vunpack.c.l.b16 %v199
    %v782 = vunpack.c.h.b16 %v199
    %v783 = vunpack.c.l.b16 %v200
    %v784 = vunpack.c.h.b16 %v200
    %v785 = vunpack.c.l.b16 %v201
    %v786 = vunpack.c.h.b16 %v201
    %v787 = vunpack.c.l.b16 %v202
    %v788 = vunpack.c.h.b16 %v202
    %v789 = vunpack.c.l.b16 %v203
    %v790 = vunpack.c.h.b16 %v203
    %v791 = vunpack.c.l.b16 %v204
    %v792 = vunpack.c.h.b16 %v204
    %v793 = vunpack.c.l.b16 %v205
    %v794 = vunpack.c.h.b16 %v205
    %v795 = vunpack.c.l.b16 %v206
    %v796 = vunpack.c.h.b16 %v206
    %v797 = vunpack.c.l.b16 %v207
    %v798 = vunpack.c.h.b16 %v207
    %v799 = vunpack.c.l.b16 %v208
    %v800 = vunpack.c.h.b16 %v208
    %v801 = vunpack.c.l.b16 %v209
    %v802 = vunpack.c.h.b16 %v209
    %v803 = vunpack.c.l.b16 %v210
    %v804 = vunpack.c.h.b16 %v210
    %v805 = vunpack.c.l.b16 %v211
    %v806 = vunpack.c.h.b16 %v211
    %v807 = vunpack.c.l.b16 %v212
    %v808 = vunpack.c.h.b16 %v212
    %v809 = vunpack.c.l.b16 %v213
    %v810 = vunpack.c.h.b16 %v213
    %v811 = vunpack.c.l.b16 %v214
    %v812 = vunpack.c.h.b16 %v214
    %v813 = vunpack.c.l.b16 %v215
    %v814 = vunpack.c.h.b16 %v215
    %v815 = vunpack.c.l.b16 %v216
    %v816 = vunpack.c.h.b16 %v216
    %v817 = vunpack.c.l.b16 %v217
    %v818 = vunpack.c.h.b16 %v217
    %v819 = vunpack.c.l.b16 %v218
    %v820 = vunpack.c.h.b16 %v218
    %v821 = vunpack.c.l.b16 %v219
    %v822 = vunpack.c.h.b16 %v219
    %v823 = vunpack.c.l.b16 %v220
    %v824 = vunpack.c.h.b16 %v220
    %v825 = vunpack.c.l.b16 %v221
    %v826 = vunpack.c.h.b16 %v221
    %v827 = vunpack.c.l.b16 %v222
    %v828 = vunpack.c.h.b16 %v222
    %v829 = vunpack.c.l.b16 %v223
    %v830 = vunpack.c.h.b16 %v223
    %v831 = vunpack.c.l.b16 %v224
    %v832 = vunpack.c.h.b16 %v224
    %v833 = vunpack.c.l.b16 %v225
    %v834 = vunpack.c.h.b16 %v225
    %v835 = vunpack.c.l.b16 %v226
    %v836 = vunpack.c.h.b16 %v226
    %v837 = vunpack.c.l.b16 %v227
    %v838 = vunpack.c.h.b16 %v227
    %v839 = vunpack.c.l.b16 %v228
    %v840 = vunpack.c.h.b16 %v228
    %v841 = vunpack.c.l.b16 %v229
    %v842 = vunpack.c.h.b16 %v229
    %v843 = vunpack.c.l.b16 %v230
    %v844 = vunpack.c.h.b16 %v230
    %v845 = vunpack.c.l.b16 %v231
    %v846 = vunpack.c.h.b16 %v231
    %v847 = vunpack.c.l.b16 %v232
    %v848 = vunpack.c.h.b16 %v232
    %v849 = vunpack.c.l.b16 %v233
    %v850 = vunpack.c.h.b16 %v233
    %v851 = vunpack.c.l.b16 %v234
    %v852 = vunpack.c.h.b16 %v234
    %v853 = vunpack.c.l.b16 %v235
    %v854 = vunpack.c.h.b16 %v235
    %v855 = vunpack.c.l.b16 %v236
    %v856 = vunpack.c.h.b16 %v236
    %v857 = vunpack.c.l.b16 %v237
    %v858 = vunpack.c.h.b16 %v237
    %v859 = vunpack.c.l.b16 %v238
    %v860 = vunpack.c.h.b16 %v238
    %v861 = vunpack.c.l.b16 %v239
    %v862 = vunpack.c.h.b16 %v239
    %v863 = vunpack.c.l.b16 %v240
    %v864 = vunpack.c.h.b16 %v240
    %v865 = vunpack.c.l.b16 %v241
    %v866 = vunpack.c.h.b16 %v241
    %v867 = vunpack.c.l.b16 %v242
    %v868 = vunpack.c.h.b16 %v242
    %v869 = vunpack.c.l.b16 %v243
    %v870 = vunpack.c.h.b16 %v243
    %v871 = vunpack.c.l.b16 %v244
    %v872 = vunpack.c.h.b16 %v244
    %v873 = vunpack.c.l.b16 %v245
    %v874 = vunpack.c.h.b16 %v245
    %v875 = vunpack.c.l.b16 %v246
    %v876 = vunpack.c.h.b16 %v246
    %v877 = vunpack.c.l.b16 %v247
    %v878 = vunpack.c.h.b16 %v247
    %v879 = vunpack.c.l.b16 %v248
    %v880 = vunpack.c.h.b16 %v248
    %v881 = vunpack.c.l.b16 %v249
    %v882 = vunpack.c.h.b16 %v249
    %v883 = vunpack.c.l.b16 %v250
    %v884 = vunpack.c.h.b16 %v250
    %v885 = vunpack.c.l.b16 %v251
    %v886 = vunpack.c.h.b16 %v251
    %v887 = vunpack.c.l.b16 %v252
    %v888 = vunpack.c.h.b16 %v252
    %v889 = vunpack.c.l.b16 %v253
    %v890 = vunpack.c.h.b16 %v253
    %v891 = vunpack.c.l.b16 %v254
    %v892 = vunpack.c.h.b16 %v254
    %v893 = vunpack.c.l.b16 %v255
    %v894 = vunpack.c.h.b16 %v255
    %v895 = vunpack.c.l.b16 %v256
    %v896 = vunpack.c.h.b16 %v256
    %v897 = vunpack.c.l.b16 %v257
    %v898 = vunpack.c.h.b16 %v257
    %v899 = vunpack.c.l.b16 %v258
    %v900 = vunpack.c.h.b16 %v258
    %v901 = vunpack.c.l.b16 %v259
    %v902 = vunpack.c.h.b16 %v259
    %v903 = vunpack.c.l.b16 %v260
    %v904 = vunpack.c.h.b16 %v260
    %v905 = vunpack.c.l.b16 %v261
    %v906 = vunpack.c.h.b16 %v261
    %v907 = vunpack.c.l.b16 %v262
    %v908 = vunpack.c.h.b16 %v262
    %v909 = vunpack.c.l.b16 %v263
    %v910 = vunpack.c.h.b16 %v263
    %v911 = vunpack.c.l.b16 %v264
    %v912 = vunpack.c.h.b16 %v264
    %v913 = vunpack.c.l.b16 %v265
    %v914 = vunpack.c.h.b16 %v265
    %v915 = vunpack.c.l.b16 %v266
    %v916 = vunpack.c.h.b16 %v266
    %v917 = vunpack.c.l.b16 %v267
    %v918 = vunpack.c.h.b16 %v267
    %v919 = vunpack.c.l.b16 %v268
    %v920 = vunpack.c.h.b16 %v268
    %v921 = vunpack.c.l.b16 %v269
    %v922 = vunpack.c.h.b16 %v269
    %v923 = vunpack.c.l.b16 %v270
    %v924 = vunpack.c.h.b16 %v270
    %v925 = vunpack.c.l.b16 %v271
    %v926 = vunpack.c.h.b16 %v271
    %v927 = vunpack.c.l.b16 %v272
    %v928 = vunpack.c.h.b16 %v272
    %v929 = vunpack.c.l.b16 %v273
    %v930 = vunpack.c.h.b16 %v273
    %v931 = vunpack.c.l.b16 %v274
    %v932 = vunpack.c.h.b16 %v274
    %v933 = vunpack.c.l.b16 %v275
    %v934 = vunpack.c.h.b16 %v275
    %v935 = vunpack.c.l.b16 %v276
    %v936 = vunpack.c.h.b16 %v276
    %v937 = vunpack.c.l.b16 %v277
    %v938 = vunpack.c.h.b16 %v277
    %v939 = vunpack.c.l.b16 %v278
    %v940 = vunpack.c.h.b16 %v278
    %v941 = vunpack.c.l.b16 %v279
    %v942 = vunpack.c.h.b16 %v279
    %v943 = vunpack.c.l.b16 %v280
    %v944 = vunpack.c.h.b16 %v280
    %v945 = vunpack.c.l.b16 %v281
    %v946 = vunpack.c.h.b16 %v281
    %v947 = vunpack.c.l.b16 %v282
    %v948 = vunpack.c.h.b16 %v282
    %v949 = vunpack.c.l.b16 %v283
    %v950 = vunpack.c.h.b16 %v283
    %v951 = vunpack.c.l.b16 %v284
    %v952 = vunpack.c.h.b16 %v284
    %v953 = vunpack.c.l.b16 %v285
    %v954 = vunpack.c.h.b16 %v285
    %v955 = vunpack.c.l.b16 %v286
    %v956 = vunpack.c.h.b16 %v286
    %v957 = vunpack.c.l.b16 %v287
    %v958 = vunpack.c.h.b16 %v287
    %v959 = vunpack.c.l.b16 %v288
    %v960 = vunpack.c.h.b16 %v288
    %v961 = vunpack.c.l.b16 %v289
    %v962 = vunpack.c.h.b16 %v289
    %v963 = vunpack.c.l.b16 %v290
    %v964 = vunpack.c.h.b16 %v290
    %v965 = vunpack.c.l.b16 %v291
    %v966 = vunpack.c.h.b16 %v291
    %v967 = vunpack.c.l.b16 %v292
    %v968 = vunpack.c.h.b16 %v292
    %v969 = vunpack.c.l.b16 %v293
    %v970 = vunpack.c.h.b16 %v293
    %v971 = vunpack.c.l.b16 %v294
    %v972 = vunpack.c.h.b16 %v294
    %v973 = vunpack.c.l.b16 %v295
    %v974 = vunpack.c.h.b16 %v295
    %v975 = vunpack.c.l.b16 %v296
    %v976 = vunpack.c.h.b16 %v296
    %v977 = vunpack.c.l.b16 %v297
    %v978 = vunpack.c.h.b16 %v297
    %v979 = vunpack.c.l.b16 %v298
    %v980 = vunpack.c.h.b16 %v298
    %v981 = vunpack.c.l.b16 %v299
    %v982 = vunpack.c.h.b16 %v299
    %v983 = vunpack.c.l.b16 %v300
    %v984 = vunpack.c.h.b16 %v300
    %v985 = vunpack.c.l.b16 %v301
    %v986 = vunpack.c.h.b16 %v301
    %v987 = vunpack.c.l.b16 %v302
    %v988 = vunpack.c.h.b16 %v302
    %v989 = vunpack.c.l.b16 %v303
    %v990 = vunpack.c.h.b16 %v303
    %v991 = vunpack.c.l.b16 %v304
    %v992 = vunpack.c.h.b16 %v304
    %v993 = vunpack.c.l.b16 %v305
    %v994 = vunpack.c.h.b16 %v305
    %v995 = vunpack.c.l.b16 %v306
    %v996 = vunpack.c.h.b16 %v306
    %v997 = vunpack.c.l.b16 %v307
    %v998 = vunpack.c.h.b16 %v307
    %v999 = vunpack.c.l.b16 %v308
    %v1000 = vunpack.c.h.b16 %v308
    %v1001 = vunpack.c.l.b16 %v309
    %v1002 = vunpack.c.h.b16 %v309
    %v1003 = vunpack.c.l.b16 %v310
    %v1004 = vunpack.c.h.b16 %v310
    %v1005 = vunpack.c.l.b16 %v311
    %v1006 = vunpack.c.h.b16 %v311
    %v1007 = vunpack.c.l.b16 %v312
    %v1008 = vunpack.c.h.b16 %v312
    %v1009 = vunpack.c.l.b16 %v313
    %v1010 = vunpack.c.h.b16 %v313
    %v1011 = vunpack.c.l.b16 %v314
    %v1012 = vunpack.c.h.b16 %v314
    %v1013 = vunpack.c.l.b16 %v315
    %v1014 = vunpack.c.h.b16 %v315
    %v1015 = vunpack.c.l.b16 %v316
    %v1016 = vunpack.c.h.b16 %v316
    %v1017 = vunpack.c.l.b16 %v317
    %v1018 = vunpack.c.h.b16 %v317
    %v1019 = vunpack.c.l.b16 %v318
    %v1020 = vunpack.c.h.b16 %v318
    %v1021 = vunpack.c.l.b16 %v319
    %v1022 = vunpack.c.h.b16 %v319
    %v1023 = vunpack.c.l.b16 %v320
    %v1024 = vunpack.c.h.b16 %v320
    %v1025 = vunpack.c.l.b16 %v321
    %v1026 = vunpack.c.h.b16 %v321
    %v1027 = vunpack.c.l.b16 %v322
    %v1028 = vunpack.c.h.b16 %v322
    %v1029 = vunpack.c.l.b16 %v323
    %v1030 = vunpack.c.h.b16 %v323
    %v1031 = vunpack.c.l.b16 %v324
    %v1032 = vunpack.c.h.b16 %v324
    %v1033 = vunpack.c.l.b16 %v325
    %v1034 = vunpack.c.h.b16 %v325
    %v1035 = vunpack.c.l.b16 %v326
    %v1036 = vunpack.c.h.b16 %v326
    %v1037 = vunpack.c.l.b16 %v327
    %v1038 = vunpack.c.h.b16 %v327
    %v1039 = vunpack.c.l.b16 %v328
    %v1040 = vunpack.c.h.b16 %v328
    %v1041 = vunpack.c.l.b16 %v329
    %v1042 = vunpack.c.h.b16 %v329
    %v1043 = vunpack.c.l.b16 %v330
    %v1044 = vunpack.c.h.b16 %v330
    %v1045 = vunpack.c.l.b16 %v331
    %v1046 = vunpack.c.h.b16 %v331
    %v1047 = vunpack.c.l.b16 %v332
    %v1048 = vunpack.c.h.b16 %v332
    %v1049 = vunpack.c.l.b16 %v333
    %v1050 = vunpack.c.h.b16 %v333
    %v1051 = vunpack.c.l.b16 %v334
    %v1052 = vunpack.c.h.b16 %v334
    %v1053 = vpack.c.b16 %v609, %v605
    %v1054 = vpack.c.b16 %v610, %v606
    %v1055 = vpack.c.b16 %v611, %v607
    %v1056 = vpack.c.b16 %v612, %v608
    %v1057 = vpack.c.b16 %v617, %v613
    %v1058 = vpack.c.b16 %v618, %v614
    %v1059 = vpack.c.b16 %v619, %v615
    %v1060 = vpack.c.b16 %v620, %v616
    %v1061 = vpack.c.b16 %v625, %v621
    %v1062 = vpack.c.b16 %v626, %v622
    %v1063 = vpack.c.b16 %v627, %v623
    %v1064 = vpack.c.b16 %v628, %v624
    %v1065 = vpack.c.b16 %v633, %v629
    %v1066 = vpack.c.b16 %v634, %v630
    %v1067 = vpack.c.b16 %v635, %v631
    %v1068 = vpack.c.b16 %v636, %v632
    %v1069 = vpack.c.b16 %v641, %v637
    %v1070 = vpack.c.b16 %v642, %v638
    %v1071 = vpack.c.b16 %v643, %v639
    %v1072 = vpack.c.b16 %v644, %v640
    %v1073 = vpack.c.b16 %v649, %v645
    %v1074 = vpack.c.b16 %v650, %v646
    %v1075 = vpack.c.b16 %v651, %v647
    %v1076 = vpack.c.b16 %v652, %v648
    %v1077 = vpack.c.b16 %v657, %v653
    %v1078 = vpack.c.b16 %v658, %v654
    %v1079 = vpack.c.b16 %v659, %v655
    %v1080 = vpack.c.b16 %v660, %v656
    %v1081 = vpack.c.b16 %v665, %v661
    %v1082 = vpack.c.b16 %v666, %v662
    %v1083 = vpack.c.b16 %v667, %v663
    %v1084 = vpack.c.b16 %v668, %v664
    %v1085 = vpack.c.b16 %v673, %v669
    %v1086 = vpack.c.b16 %v674, %v670
    %v1087 = vpack.c.b16 %v675, %v671
    %v1088 = vpack.c.b16 %v676, %v672
    %v1089 = vpack.c.b16 %v681, %v677
    %v1090 = vpack.c.b16 %v682, %v678
    %v1091 = vpack.c.b16 %v683, %v679
    %v1092 = vpack.c.b16 %v684, %v680
    %v1093 = vpack.c.b16 %v689, %v685
    %v1094 = vpack.c.b16 %v690, %v686
    %v1095 = vpack.c.b16 %v691, %v687
    %v1096 = vpack.c.b16 %v692, %v688
    %v1097 = vpack.c.b16 %v697, %v693
    %v1098 = vpack.c.b16 %v698, %v694
    %v1099 = vpack.c.b16 %v699, %v695
    %v1100 = vpack.c.b16 %v700, %v696
    %v1101 = vpack.c.b16 %v705, %v701
    %v1102 = vpack.c.b16 %v706, %v702
    %v1103 = vpack.c.b16 %v707, %v703
    %v1104 = vpack.c.b16 %v708, %v704
    %v1105 = vpack.c.b16 %v713, %v709
    %v1106 = vpack.c.b16 %v714, %v710
    %v1107 = vpack.c.b16 %v715, %v711
    %v1108 = vpack.c.b16 %v716, %v712
    %v1109 = vpack.c.b16 %v721, %v717
    %v1110 = vpack.c.b16 %v722, %v718
    %v1111 = vpack.c.b16 %v723, %v719
    %v1112 = vpack.c.b16 %v724, %v720
    %v1113 = vpack.c.b16 %v729, %v725
    %v1114 = vpack.c.b16 %v730, %v726
    %v1115 = vpack.c.b16 %v731, %v727
    %v1116 = vpack.c.b16 %v732, %v728
    %v1117 = vpack.c.b16 %v737, %v733
    %v1118 = vpack.c.b16 %v738, %v734
    %v1119 = vpack.c.b16 %v739, %v735
    %v1120 = vpack.c.b16 %v740, %v736
    %v1121 = vpack.c.b16 %v745, %v741
    %v1122 = vpack.c.b16 %v746, %v742
    %v1123 = vpack.c.b16 %v747, %v743
    %v1124 = vpack.c.b16 %v748, %v744
    %v1125 = vpack.c.b16 %v753, %v749
    %v1126 = vpack.c.b16 %v754, %v750
    %v1127 = vpack.c.b16 %v755, %v751
    %v1128 = vpack.c.b16 %v756, %v752
    %v1129 = vpack.c.b16 %v761, %v757
    %v1130 = vpack.c.b16 %v762, %v758
    %v1131 = vpack.c.b16 %v763, %v759
    %v1132 = vpack.c.b16 %v764, %v760
    %v1133 = vpack.c.b16 %v769, %v765
    %v1134 = vpack.c.b16 %v770, %v766
    %v1135 = vpack.c.b16 %v771, %v767
    %v1136 = vpack.c.b16 %v772, %v768
    %v1137 = vpack.c.b16 %v777, %v773
    %v1138 = vpack.c.b16 %v778, %v774
    %v1139 = vpack.c.b16 %v779, %v775
    %v1140 = vpack.c.b16 %v780, %v776
    %v1141 = vpack.c.b16 %v785, %v781
    %v1142 = vpack.c.b16 %v786, %v782
    %v1143 = vpack.c.b16 %v787, %v783
    %v1144 = vpack.c.b16 %v788, %v784
    %v1145 = vpack.c.b16 %v793, %v789
    %v1146 = vpack.c.b16 %v794, %v790
    %v1147 = vpack.c.b16 %v795, %v791
    %v1148 = vpack.c.b16 %v796, %v792
    %v1149 = vpack.c.b16 %v801, %v797
    %v1150 = vpack.c.b16 %v802, %v798
    %v1151 = vpack.c.b16 %v803, %v799
    %v1152 = vpack.c.b16 %v804, %v800
    %v1153 = vpack.c.b16 %v809, %v805
    %v1154 = vpack.c.b16 %v810, %v806
    %v1155 = vpack.c.b16 %v811, %v807
    %v1156 = vpack.c.b16 %v812, %v808
    %v1157 = vpack.c.b16 %v817, %v813
    %v1158 = vpack.c.b16 %v818, %v814
    %v1159 = vpack.c.b16 %v819, %v815
    %v1160 = vpack.c.b16 %v820, %v816
    %v1161 = vpack.c.b16 %v825, %v821
    %v1162 = vpack.c.b16 %v826, %v822
    %v1163 = vpack.c.b16 %v827, %v823
    %v1164 = vpack.c.b16 %v828, %v824
    %v1165 = vpack.c.b16 %v833, %v829
    %v1166 = vpack.c.b16 %v834, %v830
    %v1167 = vpack.c.b16 %v835, %v831
    %v1168 = vpack.c.b16 %v836, %v832
    %v1169 = vpack.c.b16 %v841, %v837
    %v1170 = vpack.c.b16 %v842, %v838
    %v1171 = vpack.c.b16 %v843, %v839
    %v1172 = vpack.c.b16 %v844, %v840
    %v1173 = vpack.c.b16 %v849, %v845
    %v1174 = vpack.c.b16 %v850, %v846
    %v1175 = vpack.c.b16 %v851, %v847
    %v1176 = vpack.c.b16 %v852, %v848
    %v1177 = vpack.c.b16 %v857, %v853
    %v1178 = vpack.c.b16 %v858, %v854
    %v1179 = vpack.c.b16 %v859, %v855
    %v1180 = vpack.c.b16 %v860, %v856
    %v1181 = vpack.c.b16 %v865, %v861
    %v1182 = vpack.c.b16 %v866, %v862
    %v1183 = vpack.c.b16 %v867, %v863
    %v1184 = vpack.c.b16 %v868, %v864
    %v1185 = vpack.c.b16 %v873, %v869
    %v1186 = vpack.c.b16 %v874, %v870
    %v1187 = vpack.c.b16 %v875, %v871
    %v1188 = vpack.c.b16 %v876, %v872
    %v1189 = vpack.c.b16 %v881, %v877
    %v1190 = vpack.c.b16 %v882, %v878
    %v1191 = vpack.c.b16 %v883, %v879
    %v1192 = vpack.c.b16 %v884, %v880
    %v1193 = vpack.c.b16 %v889, %v885
    %v1194 = vpack.c.b16 %v890, %v886
    %v1195 = vpack.c.b16 %v891, %v887
    %v1196 = vpack.c.b16 %v892, %v888
    %v1197 = vpack.c.b16 %v897, %v893
    %v1198 = vpack.c.b16 %v898, %v894
    %v1199 = vpack.c.b16 %v899, %v895
    %v1200 = vpack.c.b16 %v900, %v896
    %v1201 = vpack.c.b16 %v905, %v901
    %v1202 = vpack.c.b16 %v906, %v902
    %v1203 = vpack.c.b16 %v907, %v903
    %v1204 = vpack.c.b16 %v908, %v904
    %v1205 = vpack.c.b16 %v913, %v909
    %v1206 = vpack.c.b16 %v914, %v910
    %v1207 = vpack.c.b16 %v915, %v911
    %v1208 = vpack.c.b16 %v916, %v912
    %v1209 = vpack.c.b16 %v921, %v917
    %v1210 = vpack.c.b16 %v922, %v918
    %v1211 = vpack.c.b16 %v923, %v919
    %v1212 = vpack.c.b16 %v924, %v920
    %v1213 = vpack.c.b16 %v929, %v925
    %v1214 = vpack.c.b16 %v930, %v926
    %v1215 = vpack.c.b16 %v931, %v927
    %v1216 = vpack.c.b16 %v932, %v928
    %v1217 = vpack.c.b16 %v937, %v933
    %v1218 = vpack.c.b16 %v938, %v934
    %v1219 = vpack.c.b16 %v939, %v935
    %v1220 = vpack.c.b16 %v940, %v936
    %v1221 = vpack.c.b16 %v945, %v941
    %v1222 = vpack.c.b16 %v946, %v942
    %v1223 = vpack.c.b16 %v947, %v943
    %v1224 = vpack.c.b16 %v948, %v944
    %v1225 = vpack.c.b16 %v953, %v949
    %v1226 = vpack.c.b16 %v954, %v950
    %v1227 = vpack.c.b16 %v955, %v951
    %v1228 = vpack.c.b16 %v956, %v952
    %v1229 = vpack.c.b16 %v961, %v957
    %v1230 = vpack.c.b16 %v962, %v958
    %v1231 = vpack.c.b16 %v963, %v959
    %v1232 = vpack.c.b16 %v964, %v960
    %v1233 = vpack.c.b16 %v969, %v965
    %v1234 = vpack.c.b16 %v970, %v966
    %v1235 = vpack.c.b16 %v971, %v967
    %v1236 = vpack.c.b16 %v972, %v968
    %v1237 = vpack.c.b16 %v977, %v973
    %v1238 = vpack.c.b16 %v978, %v974
    %v1239 = vpack.c.b16 %v979, %v975
    %v1240 = vpack.c.b16 %v980, %v976
    %v1241 = vpack.c.b16 %v985, %v981
    %v1242 = vpack.c.b16 %v986, %v982
    %v1243 = vpack.c.b16 %v987, %v983
    %v1244 = vpack.c.b16 %v988, %v984
    %v1245 = vpack.c.b16 %v993, %v989
    %v1246 = vpack.c.b16 %v994, %v990
    %v1247 = vpack.c.b16 %v995, %v991
    %v1248 = vpack.c.b16 %v996, %v992
    %v1249 = vpack.c.b16 %v1001, %v997
    %v1250 = vpack.c.b16 %v1002, %v998
    %v1251 = vpack.c.b16 %v1003, %v999
    %v1252 = vpack.c.b16 %v1004, %v1000
    %v1253 = vpack.c.b16 %v1009, %v1005
    %v1254 = vpack.c.b16 %v1010, %v1006
    %v1255 = vpack.c.b16 %v1011, %v1007
    %v1256 = vpack.c.b16 %v1012, %v1008
    %v1257 = vpack.c.b16 %v1017, %v1013
    %v1258 = vpack.c.b16 %v1018, %v1014
    %v1259 = vpack.c.b16 %v1019, %v1015
    %v1260 = vpack.c.b16 %v1020, %v1016
    %v1261 = vpack.c.b16 %v1025, %v1021
    %v1262 = vpack.c.b16 %v1026, %v1022
    %v1263 = vpack.c.b16 %v1027, %v1023
    %v1264 = vpack.c.b16 %v1028, %v1024
    %v1265 = vpack.c.b16 %v1033, %v1029
    %v1266 = vpack.c.b16 %v1034, %v1030
    %v1267 = vpack.c.b16 %v1035, %v1031
    %v1268 = vpack.c.b16 %v1036, %v1032
    %v1269 = vpack.c.b16 %v1041, %v1037
    %v1270 = vpack.c.b16 %v1042, %v1038
    %v1271 = vpack.c.b16 %v1043, %v1039
    %v1272 = vpack.c.b16 %v1044, %v1040
    %v1273 = vpack.c.b16 %v1049, %v1045
    %v1274 = vpack.c.b16 %v1050, %v1046
    %v1275 = vpack.c.b16 %v1051, %v1047
    %v1276 = vpack.c.b16 %v1052, %v1048
    %1501 = vmatpush.bf16.msra.mxu0 %v1081
    %1502 = vmatpush.bf16.msra.mxu0 %v1077
    %1503 = vmatpush.bf16.msra.mxu0 %v1073
    %1504 = vmatpush.bf16.msra.mxu0 %v1069
    %1505 = vmatpush.bf16.msra.mxu0 %v1065
    %1506 = vmatpush.bf16.msra.mxu0 %v1061
    %1507 = vmatpush.bf16.msra.mxu0 %v1057
    %1508 = vmatpush.bf16.msra.mxu0 %v1053
    %1509 = vmatmul.bf16.gmra.mxu0 %v367
    %v1510 = vpop.f32.mrf.mxu0
    %v1511 = vadd.f32 %v337, %v1510
    %v1512 = vpop.f32.mrf.mxu0
    %v1513 = vadd.f32 %v337, %v1512
    %1514 = vdwg.mxu0
    %1515 = vmatpush.bf16.msra.mxu0 %v1113
    %1516 = vmatpush.bf16.msra.mxu0 %v1109
    %1517 = vmatpush.bf16.msra.mxu0 %v1105
    %1518 = vmatpush.bf16.msra.mxu0 %v1101
    %1519 = vmatpush.bf16.msra.mxu0 %v1097
    %1520 = vmatpush.bf16.msra.mxu0 %v1093
    %1521 = vmatpush.bf16.msra.mxu0 %v1089
    %1522 = vmatpush.bf16.msra.mxu0 %v1085
    %1523 = vmatmul.bf16.gmra.mxu0 %v368
    %v1524 = vpop.f32.mrf.mxu0
    %v1525 = vadd.f32 %v1511, %v1524
    %v1526 = vpop.f32.mrf.mxu0
    %v1527 = vadd.f32 %v1513, %v1526
    %1528 = vdwg.mxu0
    %1529 = vmatpush.bf16.msra.mxu0 %v1145
    %1530 = vmatpush.bf16.msra.mxu0 %v1141
    %1531 = vmatpush.bf16.msra.mxu0 %v1137
    %1532 = vmatpush.bf16.msra.mxu0 %v1133
    %1533 = vmatpush.bf16.msra.mxu0 %v1129
    %1534 = vmatpush.bf16.msra.mxu0 %v1125
    %1535 = vmatpush.bf16.msra.mxu0 %v1121
    %1536 = vmatpush.bf16.msra.mxu0 %v1117
    %1537 = vmatmul.bf16.gmra.mxu0 %v369
    %v1538 = vpop.f32.mrf.mxu0
    %v1539 = vadd.f32 %v1525, %v1538
    %v1540 = vpop.f32.mrf.mxu0
    %v1541 = vadd.f32 %v1527, %v1540
    %1542 = vdwg.mxu0
    %1543 = vmatpush.bf16.msra.mxu0 %v1177
    %1544 = vmatpush.bf16.msra.mxu0 %v1173
    %1545 = vmatpush.bf16.msra.mxu0 %v1169
    %1546 = vmatpush.bf16.msra.mxu0 %v1165
    %1547 = vmatpush.bf16.msra.mxu0 %v1161
    %1548 = vmatpush.bf16.msra.mxu0 %v1157
    %1549 = vmatpush.bf16.msra.mxu0 %v1153
    %1550 = vmatpush.bf16.msra.mxu0 %v1149
    %1551 = vmatmul.bf16.gmra.mxu0 %v370
    %v1552 = vpop.f32.mrf.mxu0
    %v1553 = vadd.f32 %v1539, %v1552
    %v1554 = vpop.f32.mrf.mxu0
    %v1555 = vadd.f32 %v1541, %v1554
    %1556 = vdwg.mxu0
    %1557 = vmatpush.bf16.msra.mxu0 %v1209
    %1558 = vmatpush.bf16.msra.mxu0 %v1205
    %1559 = vmatpush.bf16.msra.mxu0 %v1201
    %1560 = vmatpush.bf16.msra.mxu0 %v1197
    %1561 = vmatpush.bf16.msra.mxu0 %v1193
    %1562 = vmatpush.bf16.msra.mxu0 %v1189
    %1563 = vmatpush.bf16.msra.mxu0 %v1185
    %1564 = vmatpush.bf16.msra.mxu0 %v1181
    %1565 = vmatmul.bf16.gmra.mxu0 %v371
    %v1566 = vpop.f32.mrf.mxu0
    %v1567 = vadd.f32 %v1553, %v1566
    %v1568 = vpop.f32.mrf.mxu0
    %v1569 = vadd.f32 %v1555, %v1568
    %1570 = vdwg.mxu0
    %1571 = vmatpush.bf16.msra.mxu0 %v1241
    %1572 = vmatpush.bf16.msra.mxu0 %v1237
    %1573 = vmatpush.bf16.msra.mxu0 %v1233
    %1574 = vmatpush.bf16.msra.mxu0 %v1229
    %1575 = vmatpush.bf16.msra.mxu0 %v1225
    %1576 = vmatpush.bf16.msra.mxu0 %v1221
    %1577 = vmatpush.bf16.msra.mxu0 %v1217
    %1578 = vmatpush.bf16.msra.mxu0 %v1213
    %1579 = vmatmul.bf16.gmra.mxu0 %v372
    %v1580 = vpop.f32.mrf.mxu0
    %v1581 = vadd.f32 %v1567, %v1580
    %v1582 = vpop.f32.mrf.mxu0
    %v1583 = vadd.f32 %v1569, %v1582
    %1584 = vdwg.mxu0
    %1585 = vmatpush.bf16.msra.mxu0 %v1273
    %1586 = vmatpush.bf16.msra.mxu0 %v1269
    %1587 = vmatpush.bf16.msra.mxu0 %v1265
    %1588 = vmatpush.bf16.msra.mxu0 %v1261
    %1589 = vmatpush.bf16.msra.mxu0 %v1257
    %1590 = vmatpush.bf16.msra.mxu0 %v1253
    %1591 = vmatpush.bf16.msra.mxu0 %v1249
    %1592 = vmatpush.bf16.msra.mxu0 %v1245
    %1593 = vmatmul.bf16.gmra.mxu0 %v373
    %v1594 = vpop.f32.mrf.mxu0
    %v1595 = vadd.f32 %v1581, %v1594
    %v1596 = vpop.f32.mrf.mxu0
    %v1597 = vadd.f32 %v1583, %v1596
    %1598 = vdwg.mxu0
    %1599 = vmatpush.bf16.msra.mxu0 %v1082
    %1600 = vmatpush.bf16.msra.mxu0 %v1078
    %1601 = vmatpush.bf16.msra.mxu0 %v1074
    %1602 = vmatpush.bf16.msra.mxu0 %v1070
    %1603 = vmatpush.bf16.msra.mxu0 %v1066
    %1604 = vmatpush.bf16.msra.mxu0 %v1062
    %1605 = vmatpush.bf16.msra.mxu0 %v1058
    %1606 = vmatpush.bf16.msra.mxu0 %v1054
    %1607 = vmatmul.bf16.gmra.mxu0 %v367
    %v1608 = vpop.f32.mrf.mxu0
    %v1609 = vadd.f32 %v338, %v1608
    %v1610 = vpop.f32.mrf.mxu0
    %v1611 = vadd.f32 %v338, %v1610
    %1612 = vdwg.mxu0
    %1613 = vmatpush.bf16.msra.mxu0 %v1114
    %1614 = vmatpush.bf16.msra.mxu0 %v1110
    %1615 = vmatpush.bf16.msra.mxu0 %v1106
    %1616 = vmatpush.bf16.msra.mxu0 %v1102
    %1617 = vmatpush.bf16.msra.mxu0 %v1098
    %1618 = vmatpush.bf16.msra.mxu0 %v1094
    %1619 = vmatpush.bf16.msra.mxu0 %v1090
    %1620 = vmatpush.bf16.msra.mxu0 %v1086
    %1621 = vmatmul.bf16.gmra.mxu0 %v368
    %v1622 = vpop.f32.mrf.mxu0
    %v1623 = vadd.f32 %v1609, %v1622
    %v1624 = vpop.f32.mrf.mxu0
    %v1625 = vadd.f32 %v1611, %v1624
    %1626 = vdwg.mxu0
    %1627 = vmatpush.bf16.msra.mxu0 %v1146
    %1628 = vmatpush.bf16.msra.mxu0 %v1142
    %1629 = vmatpush.bf16.msra.mxu0 %v1138
    %1630 = vmatpush.bf16.msra.mxu0 %v1134
    %1631 = vmatpush.bf16.msra.mxu0 %v1130
    %1632 = vmatpush.bf16.msra.mxu0 %v1126
    %1633 = vmatpush.bf16.msra.mxu0 %v1122
    %1634 = vmatpush.bf16.msra.mxu0 %v1118
    %1635 = vmatmul.bf16.gmra.mxu0 %v369
    %v1636 = vpop.f32.mrf.mxu0
    %v1637 = vadd.f32 %v1623, %v1636
    %v1638 = vpop.f32.mrf.mxu0
    %v1639 = vadd.f32 %v1625, %v1638
    %1640 = vdwg.mxu0
    %1641 = vmatpush.bf16.msra.mxu0 %v1178
    %1642 = vmatpush.bf16.msra.mxu0 %v1174
    %1643 = vmatpush.bf16.msra.mxu0 %v1170
    %1644 = vmatpush.bf16.msra.mxu0 %v1166
    %1645 = vmatpush.bf16.msra.mxu0 %v1162
    %1646 = vmatpush.bf16.msra.mxu0 %v1158
    %1647 = vmatpush.bf16.msra.mxu0 %v1154
    %1648 = vmatpush.bf16.msra.mxu0 %v1150
    %1649 = vmatmul.bf16.gmra.mxu0 %v370
    %v1650 = vpop.f32.mrf.mxu0
    %v1651 = vadd.f32 %v1637, %v1650
    %v1652 = vpop.f32.mrf.mxu0
    %v1653 = vadd.f32 %v1639, %v1652
    %1654 = vdwg.mxu0
    %1655 = vmatpush.bf16.msra.mxu0 %v1210
    %1656 = vmatpush.bf16.msra.mxu0 %v1206
    %1657 = vmatpush.bf16.msra.mxu0 %v1202
    %1658 = vmatpush.bf16.msra.mxu0 %v1198
    %1659 = vmatpush.bf16.msra.mxu0 %v1194
    %1660 = vmatpush.bf16.msra.mxu0 %v1190
    %1661 = vmatpush.bf16.msra.mxu0 %v1186
    %1662 = vmatpush.bf16.msra.mxu0 %v1182
    %1663 = vmatmul.bf16.gmra.mxu0 %v371
    %v1664 = vpop.f32.mrf.mxu0
    %v1665 = vadd.f32 %v1651, %v1664
    %v1666 = vpop.f32.mrf.mxu0
    %v1667 = vadd.f32 %v1653, %v1666
    %1668 = vdwg.mxu0
    %1669 = vmatpush.bf16.msra.mxu0 %v1242
    %1670 = vmatpush.bf16.msra.mxu0 %v1238
    %1671 = vmatpush.bf16.msra.mxu0 %v1234
    %1672 = vmatpush.bf16.msra.mxu0 %v1230
    %1673 = vmatpush.bf16.msra.mxu0 %v1226
    %1674 = vmatpush.bf16.msra.mxu0 %v1222
    %1675 = vmatpush.bf16.msra.mxu0 %v1218
    %1676 = vmatpush.bf16.msra.mxu0 %v1214
    %1677 = vmatmul.bf16.gmra.mxu0 %v372
    %v1678 = vpop.f32.mrf.mxu0
    %v1679 = vadd.f32 %v1665, %v1678
    %v1680 = vpop.f32.mrf.mxu0
    %v1681 = vadd.f32 %v1667, %v1680
    %1682 = vdwg.mxu0
    %1683 = vmatpush.bf16.msra.mxu0 %v1274
    %1684 = vmatpush.bf16.msra.mxu0 %v1270
    %1685 = vmatpush.bf16.msra.mxu0 %v1266
    %1686 = vmatpush.bf16.msra.mxu0 %v1262
    %1687 = vmatpush.bf16.msra.mxu0 %v1258
    %1688 = vmatpush.bf16.msra.mxu0 %v1254
    %1689 = vmatpush.bf16.msra.mxu0 %v1250
    %1690 = vmatpush.bf16.msra.mxu0 %v1246
    %1691 = vmatmul.bf16.gmra.mxu0 %v373
    %v1692 = vpop.f32.mrf.mxu0
    %v1693 = vadd.f32 %v1679, %v1692
    %v1694 = vpop.f32.mrf.mxu0
    %v1695 = vadd.f32 %v1681, %v1694
    %1696 = vdwg.mxu0
    %1697 = vmatpush.bf16.msra.mxu0 %v1083
    %1698 = vmatpush.bf16.msra.mxu0 %v1079
    %1699 = vmatpush.bf16.msra.mxu0 %v1075
    %1700 = vmatpush.bf16.msra.mxu0 %v1071
    %1701 = vmatpush.bf16.msra.mxu0 %v1067
    %1702 = vmatpush.bf16.msra.mxu0 %v1063
    %1703 = vmatpush.bf16.msra.mxu0 %v1059
    %1704 = vmatpush.bf16.msra.mxu0 %v1055
    %1705 = vmatmul.bf16.gmra.mxu0 %v367
    %v1706 = vpop.f32.mrf.mxu0
    %v1707 = vadd.f32 %v339, %v1706
    %v1708 = vpop.f32.mrf.mxu0
    %v1709 = vadd.f32 %v339, %v1708
    %1710 = vdwg.mxu0
    %1711 = vmatpush.bf16.msra.mxu0 %v1115
    %1712 = vmatpush.bf16.msra.mxu0 %v1111
    %1713 = vmatpush.bf16.msra.mxu0 %v1107
    %1714 = vmatpush.bf16.msra.mxu0 %v1103
    %1715 = vmatpush.bf16.msra.mxu0 %v1099
    %1716 = vmatpush.bf16.msra.mxu0 %v1095
    %1717 = vmatpush.bf16.msra.mxu0 %v1091
    %1718 = vmatpush.bf16.msra.mxu0 %v1087
    %1719 = vmatmul.bf16.gmra.mxu0 %v368
    %v1720 = vpop.f32.mrf.mxu0
    %v1721 = vadd.f32 %v1707, %v1720
    %v1722 = vpop.f32.mrf.mxu0
    %v1723 = vadd.f32 %v1709, %v1722
    %1724 = vdwg.mxu0
    %1725 = vmatpush.bf16.msra.mxu0 %v1147
    %1726 = vmatpush.bf16.msra.mxu0 %v1143
    %1727 = vmatpush.bf16.msra.mxu0 %v1139
    %1728 = vmatpush.bf16.msra.mxu0 %v1135
    %1729 = vmatpush.bf16.msra.mxu0 %v1131
    %1730 = vmatpush.bf16.msra.mxu0 %v1127
    %1731 = vmatpush.bf16.msra.mxu0 %v1123
    %1732 = vmatpush.bf16.msra.mxu0 %v1119
    %1733 = vmatmul.bf16.gmra.mxu0 %v369
    %v1734 = vpop.f32.mrf.mxu0
    %v1735 = vadd.f32 %v1721, %v1734
    %v1736 = vpop.f32.mrf.mxu0
    %v1737 = vadd.f32 %v1723, %v1736
    %1738 = vdwg.mxu0
    %1739 = vmatpush.bf16.msra.mxu0 %v1179
    %1740 = vmatpush.bf16.msra.mxu0 %v1175
    %1741 = vmatpush.bf16.msra.mxu0 %v1171
    %1742 = vmatpush.bf16.msra.mxu0 %v1167
    %1743 = vmatpush.bf16.msra.mxu0 %v1163
    %1744 = vmatpush.bf16.msra.mxu0 %v1159
    %1745 = vmatpush.bf16.msra.mxu0 %v1155
    %1746 = vmatpush.bf16.msra.mxu0 %v1151
    %1747 = vmatmul.bf16.gmra.mxu0 %v370
    %v1748 = vpop.f32.mrf.mxu0
    %v1749 = vadd.f32 %v1735, %v1748
    %v1750 = vpop.f32.mrf.mxu0
    %v1751 = vadd.f32 %v1737, %v1750
    %1752 = vdwg.mxu0
    %1753 = vmatpush.bf16.msra.mxu0 %v1211
    %1754 = vmatpush.bf16.msra.mxu0 %v1207
    %1755 = vmatpush.bf16.msra.mxu0 %v1203
    %1756 = vmatpush.bf16.msra.mxu0 %v1199
    %1757 = vmatpush.bf16.msra.mxu0 %v1195
    %1758 = vmatpush.bf16.msra.mxu0 %v1191
    %1759 = vmatpush.bf16.msra.mxu0 %v1187
    %1760 = vmatpush.bf16.msra.mxu0 %v1183
    %1761 = vmatmul.bf16.gmra.mxu0 %v371
    %v1762 = vpop.f32.mrf.mxu0
    %v1763 = vadd.f32 %v1749, %v1762
    %v1764 = vpop.f32.mrf.mxu0
    %v1765 = vadd.f32 %v1751, %v1764
    %1766 = vdwg.mxu0
    %1767 = vmatpush.bf16.msra.mxu0 %v1243
    %1768 = vmatpush.bf16.msra.mxu0 %v1239
    %1769 = vmatpush.bf16.msra.mxu0 %v1235
    %1770 = vmatpush.bf16.msra.mxu0 %v1231
    %1771 = vmatpush.bf16.msra.mxu0 %v1227
    %1772 = vmatpush.bf16.msra.mxu0 %v1223
    %1773 = vmatpush.bf16.msra.mxu0 %v1219
    %1774 = vmatpush.bf16.msra.mxu0 %v1215
    %1775 = vmatmul.bf16.gmra.mxu0 %v372
    %v1776 = vpop.f32.mrf.mxu0
    %v1777 = vadd.f32 %v1763, %v1776
    %v1778 = vpop.f32.mrf.mxu0
    %v1779 = vadd.f32 %v1765, %v1778
    %1780 = vdwg.mxu0
    %1781 = vmatpush.bf16.msra.mxu0 %v1275
    %1782 = vmatpush.bf16.msra.mxu0 %v1271
    %1783 = vmatpush.bf16.msra.mxu0 %v1267
    %1784 = vmatpush.bf16.msra.mxu0 %v1263
    %1785 = vmatpush.bf16.msra.mxu0 %v1259
    %1786 = vmatpush.bf16.msra.mxu0 %v1255
    %1787 = vmatpush.bf16.msra.mxu0 %v1251
    %1788 = vmatpush.bf16.msra.mxu0 %v1247
    %1789 = vmatmul.bf16.gmra.mxu0 %v373
    %v1790 = vpop.f32.mrf.mxu0
    %v1791 = vadd.f32 %v1777, %v1790
    %v1792 = vpop.f32.mrf.mxu0
    %v1793 = vadd.f32 %v1779, %v1792
    %1794 = vdwg.mxu0
    %1795 = vmatpush.bf16.msra.mxu0 %v1084
    %1796 = vmatpush.bf16.msra.mxu0 %v1080
    %1797 = vmatpush.bf16.msra.mxu0 %v1076
    %1798 = vmatpush.bf16.msra.mxu0 %v1072
    %1799 = vmatpush.bf16.msra.mxu0 %v1068
    %1800 = vmatpush.bf16.msra.mxu0 %v1064
    %1801 = vmatpush.bf16.msra.mxu0 %v1060
    %1802 = vmatpush.bf16.msra.mxu0 %v1056
    %1803 = vmatmul.bf16.gmra.mxu0 %v367
    %v1804 = vpop.f32.mrf.mxu0
    %v1805 = vadd.f32 %v340, %v1804
    %v1806 = vpop.f32.mrf.mxu0
    %v1807 = vadd.f32 %v340, %v1806
    %1808 = vdwg.mxu0
    %1809 = vmatpush.bf16.msra.mxu0 %v1116
    %1810 = vmatpush.bf16.msra.mxu0 %v1112
    %1811 = vmatpush.bf16.msra.mxu0 %v1108
    %1812 = vmatpush.bf16.msra.mxu0 %v1104
    %1813 = vmatpush.bf16.msra.mxu0 %v1100
    %1814 = vmatpush.bf16.msra.mxu0 %v1096
    %1815 = vmatpush.bf16.msra.mxu0 %v1092
    %1816 = vmatpush.bf16.msra.mxu0 %v1088
    %1817 = vmatmul.bf16.gmra.mxu0 %v368
    %v1818 = vpop.f32.mrf.mxu0
    %v1819 = vadd.f32 %v1805, %v1818
    %v1820 = vpop.f32.mrf.mxu0
    %v1821 = vadd.f32 %v1807, %v1820
    %1822 = vdwg.mxu0
    %1823 = vmatpush.bf16.msra.mxu0 %v1148
    %1824 = vmatpush.bf16.msra.mxu0 %v1144
    %1825 = vmatpush.bf16.msra.mxu0 %v1140
    %1826 = vmatpush.bf16.msra.mxu0 %v1136
    %1827 = vmatpush.bf16.msra.mxu0 %v1132
    %1828 = vmatpush.bf16.msra.mxu0 %v1128
    %1829 = vmatpush.bf16.msra.mxu0 %v1124
    %1830 = vmatpush.bf16.msra.mxu0 %v1120
    %1831 = vmatmul.bf16.gmra.mxu0 %v369
    %v1832 = vpop.f32.mrf.mxu0
    %v1833 = vadd.f32 %v1819, %v1832
    %v1834 = vpop.f32.mrf.mxu0
    %v1835 = vadd.f32 %v1821, %v1834
    %1836 = vdwg.mxu0
    %1837 = vmatpush.bf16.msra.mxu0 %v1180
    %1838 = vmatpush.bf16.msra.mxu0 %v1176
    %1839 = vmatpush.bf16.msra.mxu0 %v1172
    %1840 = vmatpush.bf16.msra.mxu0 %v1168
    %1841 = vmatpush.bf16.msra.mxu0 %v1164
    %1842 = vmatpush.bf16.msra.mxu0 %v1160
    %1843 = vmatpush.bf16.msra.mxu0 %v1156
    %1844 = vmatpush.bf16.msra.mxu0 %v1152
    %1845 = vmatmul.bf16.gmra.mxu0 %v370
    %v1846 = vpop.f32.mrf.mxu0
    %v1847 = vadd.f32 %v1833, %v1846
    %v1848 = vpop.f32.mrf.mxu0
    %v1849 = vadd.f32 %v1835, %v1848
    %1850 = vdwg.mxu0
    %1851 = vmatpush.bf16.msra.mxu0 %v1212
    %1852 = vmatpush.bf16.msra.mxu0 %v1208
    %1853 = vmatpush.bf16.msra.mxu0 %v1204
    %1854 = vmatpush.bf16.msra.mxu0 %v1200
    %1855 = vmatpush.bf16.msra.mxu0 %v1196
    %1856 = vmatpush.bf16.msra.mxu0 %v1192
    %1857 = vmatpush.bf16.msra.mxu0 %v1188
    %1858 = vmatpush.bf16.msra.mxu0 %v1184
    %1859 = vmatmul.bf16.gmra.mxu0 %v371
    %v1860 = vpop.f32.mrf.mxu0
    %v1861 = vadd.f32 %v1847, %v1860
    %v1862 = vpop.f32.mrf.mxu0
    %v1863 = vadd.f32 %v1849, %v1862
    %1864 = vdwg.mxu0
    %1865 = vmatpush.bf16.msra.mxu0 %v1244
    %1866 = vmatpush.bf16.msra.mxu0 %v1240
    %1867 = vmatpush.bf16.msra.mxu0 %v1236
    %1868 = vmatpush.bf16.msra.mxu0 %v1232
    %1869 = vmatpush.bf16.msra.mxu0 %v1228
    %1870 = vmatpush.bf16.msra.mxu0 %v1224
    %1871 = vmatpush.bf16.msra.mxu0 %v1220
    %1872 = vmatpush.bf16.msra.mxu0 %v1216
    %1873 = vmatmul.bf16.gmra.mxu0 %v372
    %v1874 = vpop.f32.mrf.mxu0
    %v1875 = vadd.f32 %v1861, %v1874
    %v1876 = vpop.f32.mrf.mxu0
    %v1877 = vadd.f32 %v1863, %v1876
    %1878 = vdwg.mxu0
    %1879 = vmatpush.bf16.msra.mxu0 %v1276
    %1880 = vmatpush.bf16.msra.mxu0 %v1272
    %1881 = vmatpush.bf16.msra.mxu0 %v1268
    %1882 = vmatpush.bf16.msra.mxu0 %v1264
    %1883 = vmatpush.bf16.msra.mxu0 %v1260
    %1884 = vmatpush.bf16.msra.mxu0 %v1256
    %1885 = vmatpush.bf16.msra.mxu0 %v1252
    %1886 = vmatpush.bf16.msra.mxu0 %v1248
    %1887 = vmatmul.bf16.gmra.mxu0 %v373
    %v1888 = vpop.f32.mrf.mxu0
    %v1889 = vadd.f32 %v1875, %v1888
    %v1890 = vpop.f32.mrf.mxu0
    %v1891 = vadd.f32 %v1877, %v1890
    %1892 = vdwg.mxu0
    %v1893 = vmax.f32 %v1595, 0.0
    %v1894 = vmax.f32 %v1693, 0.0
    %v1895 = vmax.f32 %v1791, 0.0
    %v1896 = vmax.f32 %v1889, 0.0
    %v1897 = vmax.f32 %v1597, 0.0
    %v1898 = vmax.f32 %v1695, 0.0
    %v1899 = vmax.f32 %v1793, 0.0
    %v1900 = vmax.f32 %v1891, 0.0
    %v1901 = vpack.c.bf16 %v1897, %v1893
    %v1902 = vpack.c.bf16 %v1898, %v1894
    %v1903 = vpack.c.bf16 %v1899, %v1895
    %v1904 = vpack.c.bf16 %v1900, %v1896
    %v1905 = vld [vmem:[#allocation8] sm:$0xf]
    %v1906 = vld [vmem:[#allocation8 + $0x4] sm:$0xf]
    %v1907 = vld [vmem:[#allocation8 + $0x8] sm:$0xf]
    %v1908 = vld [vmem:[#allocation8 + $0xc] sm:$0xf]
    %v1909 = vld [vmem:[#allocation8 + $0x10] sm:$0xf]
    %v1910 = vld [vmem:[#allocation8 + $0x14] sm:$0xf]
    %v1911 = vld [vmem:[#allocation8 + $0x18] sm:$0xf]
    %v1912 = vld [vmem:[#allocation8 + $0x1c] sm:$0xf]
    %v1913 = vld [vmem:[#allocation8 + $0x20] sm:$0xf]
    %v1914 = vld [vmem:[#allocation8 + $0x24] sm:$0xf]
    %v1915 = vld [vmem:[#allocation8 + $0x28] sm:$0xf]
    %v1916 = vld [vmem:[#allocation8 + $0x2c] sm:$0xf]
    %v1917 = vld [vmem:[#allocation8 + $0x30] sm:$0xf]
    %v1918 = vld [vmem:[#allocation8 + $0x34] sm:$0xf]
    %v1919 = vld [vmem:[#allocation8 + $0x38] sm:$0xf]
    %v1920 = vld [vmem:[#allocation8 + $0x3c] sm:$0xf]
    %v1921 = vld [vmem:[#allocation8 + $0x40] sm:$0xf]
    %v1922 = vld [vmem:[#allocation8 + $0x44] sm:$0xf]
    %v1923 = vld [vmem:[#allocation8 + $0x48] sm:$0xf]
    %v1924 = vld [vmem:[#allocation8 + $0x4c] sm:$0xf]
    %v1925 = vld [vmem:[#allocation8 + $0x50] sm:$0xf]
    %v1926 = vld [vmem:[#allocation8 + $0x54] sm:$0xf]
    %v1927 = vld [vmem:[#allocation8 + $0x58] sm:$0xf]
    %v1928 = vld [vmem:[#allocation8 + $0x5c] sm:$0xf]
    %v1929 = vld [vmem:[#allocation8 + $0x60] sm:$0xf]
    %v1930 = vld [vmem:[#allocation8 + $0x64] sm:$0xf]
    %v1931 = vld [vmem:[#allocation8 + $0x68] sm:$0xf]
    %v1932 = vld [vmem:[#allocation8 + $0x6c] sm:$0xf]
    %v1933 = vld [vmem:[#allocation8 + $0x70] sm:$0xf]
    %v1934 = vld [vmem:[#allocation8 + $0x74] sm:$0xf]
    %v1935 = vld [vmem:[#allocation8 + $0x78] sm:$0xf]
    %v1936 = vld [vmem:[#allocation8 + $0x7c] sm:$0xf]
    %v1937 = vld [vmem:[#allocation8 + $0x80] sm:$0xf]
    %v1938 = vld [vmem:[#allocation8 + $0x84] sm:$0xf]
    %v1939 = vld [vmem:[#allocation8 + $0x88] sm:$0xf]
    %v1940 = vld [vmem:[#allocation8 + $0x8c] sm:$0xf]
    %v1941 = vld [vmem:[#allocation8 + $0x90] sm:$0xf]
    %v1942 = vld [vmem:[#allocation8 + $0x94] sm:$0xf]
    %v1943 = vld [vmem:[#allocation8 + $0x98] sm:$0xf]
    %v1944 = vld [vmem:[#allocation8 + $0x9c] sm:$0xf]
    %v1945 = vld [vmem:[#allocation8 + $0xa0] sm:$0xf]
    %v1946 = vld [vmem:[#allocation8 + $0xa4] sm:$0xf]
    %v1947 = vld [vmem:[#allocation8 + $0xa8] sm:$0xf]
    %v1948 = vld [vmem:[#allocation8 + $0xac] sm:$0xf]
    %v1949 = vld [vmem:[#allocation8 + $0xb0] sm:$0xf]
    %v1950 = vld [vmem:[#allocation8 + $0xb4] sm:$0xf]
    %v1951 = vld [vmem:[#allocation8 + $0xb8] sm:$0xf]
    %v1952 = vld [vmem:[#allocation8 + $0xbc] sm:$0xf]
    %v1953 = vld [vmem:[#allocation8 + $0xc0] sm:$0xf]
    %v1954 = vld [vmem:[#allocation8 + $0xc4] sm:$0xf]
    %v1955 = vld [vmem:[#allocation8 + $0xc8] sm:$0xf]
    %v1956 = vld [vmem:[#allocation8 + $0xcc] sm:$0xf]
    %v1957 = vld [vmem:[#allocation8 + $0xd0] sm:$0xf]
    %v1958 = vld [vmem:[#allocation8 + $0xd4] sm:$0xf]
    %v1959 = vld [vmem:[#allocation8 + $0xd8] sm:$0xf]
    %v1960 = vld [vmem:[#allocation8 + $0xdc] sm:$0xf]
    %v1961 = vld [vmem:[#allocation8 + $0xe0] sm:$0xf]
    %v1962 = vld [vmem:[#allocation8 + $0xe4] sm:$0xf]
    %v1963 = vld [vmem:[#allocation8 + $0xe8] sm:$0xf]
    %v1964 = vld [vmem:[#allocation8 + $0xec] sm:$0xf]
    %v1965 = vld [vmem:[#allocation8 + $0xf0] sm:$0xf]
    %v1966 = vld [vmem:[#allocation8 + $0xf4] sm:$0xf]
    %v1967 = vld [vmem:[#allocation8 + $0xf8] sm:$0xf]
    %v1968 = vld [vmem:[#allocation8 + $0xfc] sm:$0xf]
    %v1969 = vld [vmem:[%s4] sm:$0x1]
    %v1971 = vperm.slane %v1969, 0
    %v2037 = vunpack.c.l.b16 %v1905
    %v2038 = vunpack.c.l.b16 %v1906
    %v2039 = vunpack.c.l.b16 %v1907
    %v2040 = vunpack.c.l.b16 %v1908
    %v2041 = vunpack.c.l.b16 %v1909
    %v2042 = vunpack.c.l.b16 %v1910
    %v2043 = vunpack.c.l.b16 %v1911
    %v2044 = vunpack.c.l.b16 %v1912
    %v2045 = vunpack.c.l.b16 %v1913
    %v2046 = vunpack.c.l.b16 %v1914
    %v2047 = vunpack.c.l.b16 %v1915
    %v2048 = vunpack.c.l.b16 %v1916
    %v2049 = vunpack.c.l.b16 %v1917
    %v2050 = vunpack.c.l.b16 %v1918
    %v2051 = vunpack.c.l.b16 %v1919
    %v2052 = vunpack.c.l.b16 %v1920
    %v2053 = vunpack.c.l.b16 %v1921
    %v2054 = vunpack.c.l.b16 %v1922
    %v2055 = vunpack.c.l.b16 %v1923
    %v2056 = vunpack.c.l.b16 %v1924
    %v2057 = vunpack.c.l.b16 %v1925
    %v2058 = vunpack.c.l.b16 %v1926
    %v2059 = vunpack.c.l.b16 %v1927
    %v2060 = vunpack.c.l.b16 %v1928
    %v2061 = vunpack.c.l.b16 %v1929
    %v2062 = vunpack.c.l.b16 %v1930
    %v2063 = vunpack.c.l.b16 %v1931
    %v2064 = vunpack.c.l.b16 %v1932
    %v2065 = vunpack.c.l.b16 %v1933
    %v2066 = vunpack.c.l.b16 %v1934
    %v2067 = vunpack.c.l.b16 %v1935
    %v2068 = vunpack.c.l.b16 %v1936
    %v2069 = vunpack.c.l.b16 %v1937
    %v2070 = vunpack.c.l.b16 %v1938
    %v2071 = vunpack.c.l.b16 %v1939
    %v2072 = vunpack.c.l.b16 %v1940
    %v2073 = vunpack.c.l.b16 %v1941
    %v2074 = vunpack.c.l.b16 %v1942
    %v2075 = vunpack.c.l.b16 %v1943
    %v2076 = vunpack.c.l.b16 %v1944
    %v2077 = vunpack.c.l.b16 %v1945
    %v2078 = vunpack.c.l.b16 %v1946
    %v2079 = vunpack.c.l.b16 %v1947
    %v2080 = vunpack.c.l.b16 %v1948
    %v2081 = vunpack.c.l.b16 %v1949
    %v2082 = vunpack.c.l.b16 %v1950
    %v2083 = vunpack.c.l.b16 %v1951
    %v2084 = vunpack.c.l.b16 %v1952
    %v2085 = vunpack.c.l.b16 %v1953
    %v2086 = vunpack.c.l.b16 %v1954
    %v2087 = vunpack.c.l.b16 %v1955
    %v2088 = vunpack.c.l.b16 %v1956
    %v2089 = vunpack.c.l.b16 %v1957
    %v2090 = vunpack.c.l.b16 %v1958
    %v2091 = vunpack.c.l.b16 %v1959
    %v2092 = vunpack.c.l.b16 %v1960
    %v2093 = vunpack.c.l.b16 %v1961
    %v2094 = vunpack.c.l.b16 %v1962
    %v2095 = vunpack.c.l.b16 %v1963
    %v2096 = vunpack.c.l.b16 %v1964
    %v2097 = vunpack.c.l.b16 %v1965
    %v2098 = vunpack.c.l.b16 %v1966
    %v2099 = vunpack.c.l.b16 %v1967
    %v2100 = vunpack.c.l.b16 %v1968
    %v2101 = vpack.c.b16 %v2038, %v2037
    %v2102 = vpack.c.b16 %v2040, %v2039
    %v2103 = vpack.c.b16 %v2042, %v2041
    %v2104 = vpack.c.b16 %v2044, %v2043
    %v2105 = vpack.c.b16 %v2046, %v2045
    %v2106 = vpack.c.b16 %v2048, %v2047
    %v2107 = vpack.c.b16 %v2050, %v2049
    %v2108 = vpack.c.b16 %v2052, %v2051
    %v2109 = vpack.c.b16 %v2054, %v2053
    %v2110 = vpack.c.b16 %v2056, %v2055
    %v2111 = vpack.c.b16 %v2058, %v2057
    %v2112 = vpack.c.b16 %v2060, %v2059
    %v2113 = vpack.c.b16 %v2062, %v2061
    %v2114 = vpack.c.b16 %v2064, %v2063
    %v2115 = vpack.c.b16 %v2066, %v2065
    %v2116 = vpack.c.b16 %v2068, %v2067
    %v2117 = vpack.c.b16 %v2070, %v2069
    %v2118 = vpack.c.b16 %v2072, %v2071
    %v2119 = vpack.c.b16 %v2074, %v2073
    %v2120 = vpack.c.b16 %v2076, %v2075
    %v2121 = vpack.c.b16 %v2078, %v2077
    %v2122 = vpack.c.b16 %v2080, %v2079
    %v2123 = vpack.c.b16 %v2082, %v2081
    %v2124 = vpack.c.b16 %v2084, %v2083
    %v2125 = vpack.c.b16 %v2086, %v2085
    %v2126 = vpack.c.b16 %v2088, %v2087
    %v2127 = vpack.c.b16 %v2090, %v2089
    %v2128 = vpack.c.b16 %v2092, %v2091
    %v2129 = vpack.c.b16 %v2094, %v2093
    %v2130 = vpack.c.b16 %v2096, %v2095
    %v2131 = vpack.c.b16 %v2098, %v2097
    %v2132 = vpack.c.b16 %v2100, %v2099
    %2165 = vmatpush.bf16.msra.mxu0 %v2108
    %2166 = vmatpush.bf16.msra.mxu0 %v2107
    %2167 = vmatpush.bf16.msra.mxu0 %v2106
    %2168 = vmatpush.bf16.msra.mxu0 %v2105
    %2169 = vmatpush.bf16.msra.mxu0 %v2104
    %2170 = vmatpush.bf16.msra.mxu0 %v2103
    %2171 = vmatpush.bf16.msra.mxu0 %v2102
    %2172 = vmatpush.bf16.msra.mxu0 %v2101
    %2173 = vmatmul.bf16.gmra.mxu0 %v1901
    %v2174 = vpop.f32.mrf.mxu0
    %v2175 = vadd.f32 %v1971, %v2174
    %v2176 = vpop.f32.mrf.mxu0
    %v2177 = vadd.f32 %v1971, %v2176
    %2178 = vdwg.mxu0
    %2179 = vmatpush.bf16.msra.mxu0 %v2116
    %2180 = vmatpush.bf16.msra.mxu0 %v2115
    %2181 = vmatpush.bf16.msra.mxu0 %v2114
    %2182 = vmatpush.bf16.msra.mxu0 %v2113
    %2183 = vmatpush.bf16.msra.mxu0 %v2112
    %2184 = vmatpush.bf16.msra.mxu0 %v2111
    %2185 = vmatpush.bf16.msra.mxu0 %v2110
    %2186 = vmatpush.bf16.msra.mxu0 %v2109
    %2187 = vmatmul.bf16.gmra.mxu0 %v1902
    %v2188 = vpop.f32.mrf.mxu0
    %v2189 = vadd.f32 %v2175, %v2188
    %v2190 = vpop.f32.mrf.mxu0
    %v2191 = vadd.f32 %v2177, %v2190
    %2192 = vdwg.mxu0
    %2193 = vmatpush.bf16.msra.mxu0 %v2124
    %2194 = vmatpush.bf16.msra.mxu0 %v2123
    %2195 = vmatpush.bf16.msra.mxu0 %v2122
    %2196 = vmatpush.bf16.msra.mxu0 %v2121
    %2197 = vmatpush.bf16.msra.mxu0 %v2120
    %2198 = vmatpush.bf16.msra.mxu0 %v2119
    %2199 = vmatpush.bf16.msra.mxu0 %v2118
    %2200 = vmatpush.bf16.msra.mxu0 %v2117
    %2201 = vmatmul.bf16.gmra.mxu0 %v1903
    %v2202 = vpop.f32.mrf.mxu0
    %v2203 = vadd.f32 %v2189, %v2202
    %v2204 = vpop.f32.mrf.mxu0
    %v2205 = vadd.f32 %v2191, %v2204
    %2206 = vdwg.mxu0
    %2207 = vmatpush.bf16.msra.mxu0 %v2132
    %2208 = vmatpush.bf16.msra.mxu0 %v2131
    %2209 = vmatpush.bf16.msra.mxu0 %v2130
    %2210 = vmatpush.bf16.msra.mxu0 %v2129
    %2211 = vmatpush.bf16.msra.mxu0 %v2128
    %2212 = vmatpush.bf16.msra.mxu0 %v2127
    %2213 = vmatpush.bf16.msra.mxu0 %v2126
    %2214 = vmatpush.bf16.msra.mxu0 %v2125
    %2215 = vmatmul.bf16.gmra.mxu0 %v1904
    %v2216 = vpop.f32.mrf.mxu0
    %v2217 = vadd.f32 %v2203, %v2216
    %v2218 = vpop.f32.mrf.mxu0
    %v2219 = vadd.f32 %v2205, %v2218
    %2220 = vdwg.mxu0
    %v2221 = vmax.f32 %v2217, 0.0
    %v2222 = vmax.f32 %v2219, 0.0
    %v2223 = vpack.c.bf16 %v2222, %v2221
    %v2224 = vld [vmem:[#allocation10] sm:$0xf]
    %v2225 = vld [vmem:[#allocation10 + $0x4] sm:$0xf]
    %v2226 = vld [vmem:[#allocation10 + $0x8] sm:$0xf]
    %v2227 = vld [vmem:[#allocation10 + $0xc] sm:$0xf]
    %v2228 = vld [vmem:[#allocation10 + $0x10] sm:$0xf]
    %v2229 = vld [vmem:[#allocation10 + $0x14] sm:$0xf]
    %v2230 = vld [vmem:[#allocation10 + $0x18] sm:$0xf]
    %v2231 = vld [vmem:[#allocation10 + $0x1c] sm:$0xf]
    %v2232 = vld [vmem:[#allocation10 + $0x20] sm:$0xf]
    %v2233 = vld [vmem:[#allocation10 + $0x24] sm:$0xf]
    %v2234 = vld [vmem:[#allocation10 + $0x28] sm:$0xf]
    %v2235 = vld [vmem:[#allocation10 + $0x2c] sm:$0xf]
    %v2236 = vld [vmem:[#allocation10 + $0x30] sm:$0xf]
    %v2237 = vld [vmem:[#allocation10 + $0x34] sm:$0xf]
    %v2238 = vld [vmem:[#allocation10 + $0x38] sm:$0xf]
    %v2239 = vld [vmem:[#allocation10 + $0x3c] sm:$0xf]
    %v2240 = vld [vmem:[%s6] sm:$0x1]
    %v2242 = vperm.slane %v2240, 0
    %v2260 = vunpack.c.l.b16 %v2224
    %v2261 = vunpack.c.l.b16 %v2225
    %v2262 = vunpack.c.l.b16 %v2226
    %v2263 = vunpack.c.l.b16 %v2227
    %v2264 = vunpack.c.l.b16 %v2228
    %v2265 = vunpack.c.l.b16 %v2229
    %v2266 = vunpack.c.l.b16 %v2230
    %v2267 = vunpack.c.l.b16 %v2231
    %v2268 = vunpack.c.l.b16 %v2232
    %v2269 = vunpack.c.l.b16 %v2233
    %v2270 = vunpack.c.l.b16 %v2234
    %v2271 = vunpack.c.l.b16 %v2235
    %v2272 = vunpack.c.l.b16 %v2236
    %v2273 = vunpack.c.l.b16 %v2237
    %v2274 = vunpack.c.l.b16 %v2238
    %v2275 = vunpack.c.l.b16 %v2239
    %v2276 = vpack.c.b16 %v2261, %v2260
    %v2277 = vpack.c.b16 %v2263, %v2262
    %v2278 = vpack.c.b16 %v2265, %v2264
    %v2279 = vpack.c.b16 %v2267, %v2266
    %v2280 = vpack.c.b16 %v2269, %v2268
    %v2281 = vpack.c.b16 %v2271, %v2270
    %v2282 = vpack.c.b16 %v2273, %v2272
    %v2283 = vpack.c.b16 %v2275, %v2274
    %2292 = vmatpush.bf16.msra.mxu0 %v2283
    %2293 = vmatpush.bf16.msra.mxu0 %v2282
    %2294 = vmatpush.bf16.msra.mxu0 %v2281
    %2295 = vmatpush.bf16.msra.mxu0 %v2280
    %2296 = vmatpush.bf16.msra.mxu0 %v2279
    %2297 = vmatpush.bf16.msra.mxu0 %v2278
    %2298 = vmatpush.bf16.msra.mxu0 %v2277
    %2299 = vmatpush.bf16.msra.mxu0 %v2276
    %2300 = vmatmul.bf16.gmra.mxu0 %v2223
    %v2301 = vpop.f32.mrf.mxu0
    %v2302 = vadd.f32 %v2242, %v2301
    %v2303 = vpop.f32.mrf.mxu0
    %v2304 = vadd.f32 %v2242, %v2303
    %2305 = vdwg.mxu0
    %2306 = vst [vmem:[#allocation11] sm:$0xff] %v2302
    %2307 = vst [vmem:[#allocation11 + $0x8] sm:$0xff] %v2304
    // Predicated region
    $region50: #{tpu_custom_call.1} parent=1 // pred_check
      _
    $region51: #{tpu_custom_call.1} parent=1 // pred_check_branch
      %2309 = sbr.rel (0) target = $region53
    $region52: #{tpu_custom_call.1} parent=1 // pred_region
      %2311 = vsyncadd [#allocation4], 0
      %s2312 = sshll.u32 [#allocation11], 4
      %s2313 = int_to_ptr.vmem [resolvable:$true] %s2312
      %s2314 = sshll.u32 %s7, 4
      %s2315 = int_to_ptr.hbm [resolvable:$true] %s2314
      %2320 = dma.vmem_to_hbm [thread:$0]  %s2313, 256, %s2315, [#allocation4], 128, 128, 8
    $region53: #{tpu_custom_call.1} parent=1 // pred_fallthru
      _
    // Predicated region
    $region54: #{tpu_custom_call.1} parent=1 // pred_check
      _
    $region55: #{tpu_custom_call.1} parent=1 // pred_check_branch
      %2322 = sbr.rel (0) target = $region57
    $region56: #{tpu_custom_call.1} parent=1 // pred_region
      %2324 = dma.done [#allocation4], 256
    $region57: #{tpu_custom_call.1} parent=1 // pred_fallthru
      _
    %2325 = vsyncpa [#allocation3], 1
    %2326 = vsyncpa [#allocation6], 1
    %2327 = vsyncpa [#allocation9], 1
    %2328 = vsyncpa [#allocation4], 1

</llo_original>
